<compile_context>
chip_gen: v7x
topology: tpu7x:2x2x1
jax: 0.10.0
libtpu: 0.0.40
codegen_flags: <defaults>
</compile_context>

<pallas_src>
import numpy as np
import jax
import jax.numpy as jnp
from jax.experimental import pallas as pl
from jax.experimental.pallas import tpu as pltpu

IN_DIM = 1568        # 56 * 28
H1 = 256
H2 = 128
N_MASKS = 98         # 14 * 7
N_MASKS_PAD = 128    # padded to a full lane width


def _round_up(a: int, m: int) -> int:
    return ((a + m - 1) // m) * m


def generate_masks() -> jnp.ndarray:
    """Same construction as Focuser.generate_masks(), padded 98 -> 128 rows (zeros)."""
    masks = np.zeros((N_MASKS_PAD, 56, 28), dtype=np.float32)
    idx = 0
    for i in range(14):
        for j in range(7):
            masks[idx, i * 4:(i + 1) * 4, j * 4:(j + 1) * 4] = 1.0
            idx += 1
    # rows 98..127 stay all-zero: padded sigmoid columns contribute nothing.
    return jnp.asarray(masks.reshape(N_MASKS_PAD, -1)).astype(jnp.bfloat16)


def init_params(key):
    """Deterministic PyTorch-Linear-style uniform init (synthetic weights)."""
    def linear(k, fan_in, fan_out):
        k_w, k_b = jax.random.split(k)
        bound = 1.0 / np.sqrt(fan_in)
        # Stored already transposed: (fan_in, fan_out), so kernel does x @ W.
        w = jax.random.uniform(k_w, (fan_in, fan_out), jnp.float32, -bound, bound)
        b = jax.random.uniform(k_b, (1, fan_out), jnp.float32, -bound, bound)
        return w, b

    k1, k2, k3 = jax.random.split(key, 3)
    w1, b1 = linear(k1, IN_DIM, H1)
    w2, b2 = linear(k2, H1, H2)
    w3, b3 = linear(k3, H2, N_MASKS)

    # Pad the 98-wide output layer to 128 lanes with zeros.
    w3 = jnp.pad(w3, ((0, 0), (0, N_MASKS_PAD - N_MASKS)))
    b3 = jnp.pad(b3, ((0, 0), (0, N_MASKS_PAD - N_MASKS)))

    # Weights in bf16 (halved HBM traffic, bf16 MXU); biases stay f32.
    return (w1.astype(jnp.bfloat16), b1,
            w2.astype(jnp.bfloat16), b2,
            w3.astype(jnp.bfloat16), b3)


def focuser_kernel(x_ref, w1_ref, b1_ref, w2_ref, b2_ref, w3_ref, b3_ref,
                   masks_ref, out_ref):
    x = x_ref[...]                                             # (TB, 1568) bf16
    # Linear(1568 -> 256) + ReLU      (bf16 MXU, f32 accumulate)
    h1 = jnp.dot(x, w1_ref[...],
                 preferred_element_type=jnp.float32) + b1_ref[...]
    h1 = jnp.maximum(h1, 0.0)
    # Linear(256 -> 128) + ReLU
    h2 = jnp.dot(h1.astype(jnp.bfloat16), w2_ref[...],
                 preferred_element_type=jnp.float32) + b2_ref[...]
    h2 = jnp.maximum(h2, 0.0)
    # Linear(128 -> 128[=98 padded]) + Sigmoid
    logits = jnp.dot(h2.astype(jnp.bfloat16), w3_ref[...],
                     preferred_element_type=jnp.float32) + b3_ref[...]
    w = jax.nn.sigmoid(logits)                                 # (TB, 128) f32
    # einsum('ij,jk->ijk', w, masks).sum(dim=1) == w @ masks
    # Padded columns (98..127) hit all-zero mask rows -> no contribution.
    out_ref[...] = jnp.dot(w.astype(jnp.bfloat16), masks_ref[...],
                           preferred_element_type=jnp.float32
                           ).astype(out_ref.dtype)


def focuser_forward(x, params, masks, *, block_b=1024, out_dtype=jnp.bfloat16):
    w1, b1, w2, b2, w3, b3 = params
    B = x.shape[0]

    # Stream x in bf16 (halves the input DMA).  Ideally the producer already
    # hands bf16 so this cast fuses upstream; kept as a fallback for f32 input.
    if x.dtype != jnp.bfloat16:
        x = x.astype(jnp.bfloat16)

    # --- batch tiling --------------------------------------------------------
    b_min = _round_up(max(B, 8), 8)              # at least one (8, *) sublane tile
    if b_min <= block_b:
        # Whole batch fits in one tile.  Split big batches into two tiles so the
        # "parallel" batch axis can shard across the two TensorCores on v7x.
        tb = _round_up(pl.cdiv(b_min, 2), 256) if b_min >= 1024 else b_min
    else:
        tb = block_b
    b_pad = _round_up(b_min, tb)
    if b_pad != B:
        x = jnp.pad(x, ((0, b_pad - B), (0, 0)))
    grid = (b_pad // tb,)

    stream_spec = pl.BlockSpec((tb, IN_DIM), lambda i: (i, 0))        # x / out

    def resident(shape):                                              # weights etc.
        return pl.BlockSpec(shape, lambda i: (0, 0))

    # --- cost estimate (advisory, helps XLA scheduling in larger graphs) -----
    flops = 2 * b_pad * (IN_DIM * H1 + H1 * H2 + H2 * N_MASKS_PAD
                         + N_MASKS_PAD * IN_DIM)
    param_bytes = sum(int(a.size) * a.dtype.itemsize
                      for a in (w1, b1, w2, b2, w3, b3, masks))
    bytes_accessed = (b_pad * IN_DIM * 2                              # x   bf16
                      + b_pad * IN_DIM * jnp.dtype(out_dtype).itemsize  # out
                      + param_bytes)
    cost = pl.CostEstimate(flops=flops,
                           transcendentals=b_pad * N_MASKS_PAD,      # sigmoid
                           bytes_accessed=bytes_accessed)

    out = pl.pallas_call(
        focuser_kernel,
        out_shape=jax.ShapeDtypeStruct((b_pad, IN_DIM), out_dtype),
        grid=grid,
        in_specs=[
            stream_spec,                         # x          (TB, 1568) bf16
            resident((IN_DIM, H1)),              # w1         bf16
            resident((1, H1)),                   # b1         f32
            resident((H1, H2)),                  # w2         bf16
            resident((1, H2)),                   # b2         f32
            resident((H2, N_MASKS_PAD)),         # w3 (padded) bf16
            resident((1, N_MASKS_PAD)),          # b3 (padded) f32
            resident((N_MASKS_PAD, IN_DIM)),     # masks (padded) bf16
        ],
        out_specs=stream_spec,
        compiler_params=pltpu.CompilerParams(
            dimension_semantics=("parallel",),   # megacore-shard batch tiles (v7x)
            vmem_limit_bytes=48 * 1024 * 1024,   # explicit; fits v5e/v6e/v7x
        ),
        cost_estimate=cost,
    )(x, w1, b1, w2, b2, w3, b3, masks)
    return out[:B]


def focuser_reference(x, params, masks):
    """Pure-JAX reference with the same bf16-stream / f32-accumulate numerics."""
    w1, b1, w2, b2, w3, b3 = params
    f32 = jnp.float32
    xb = x.astype(jnp.bfloat16)
    h1 = jnp.maximum(jnp.dot(xb, w1, preferred_element_type=f32) + b1, 0.0)
    h2 = jnp.maximum(jnp.dot(h1.astype(jnp.bfloat16), w2,
                             preferred_element_type=f32) + b2, 0.0)
    w = jax.nn.sigmoid(jnp.dot(h2.astype(jnp.bfloat16), w3,
                               preferred_element_type=f32) + b3)
    out = jnp.dot(w.astype(jnp.bfloat16), masks, preferred_element_type=f32)
    return out.astype(jnp.bfloat16)


if __name__ == "__main__":
    key = jax.random.PRNGKey(0)
    k_x, k_p = jax.random.split(key)

    B = 2
    # In production the upstream producer hands bf16 activations directly; the
    # one-time cast here stands in for that (kept outside the kernel path).
    x = jax.random.normal(k_x, (B, IN_DIM), dtype=jnp.float32).astype(jnp.bfloat16)
    params = init_params(k_p)
    masks = generate_masks()

    out = focuser_forward(x, params, masks)
    out = jax.block_until_ready(out)

    ref = focuser_reference(x, params, masks)
    assert out.shape == (B, IN_DIM)
    assert out.dtype == jnp.bfloat16
    np.testing.assert_allclose(np.asarray(out, dtype=np.float32),
                               np.asarray(ref, dtype=np.float32),
                               rtol=2e-2, atol=2e-2)

    print("KERNEL_OK")
</pallas_src>

<mosaic_0001>
module attributes {stable_mosaic.version = 11 : i64} {
  func.func @focuser_kernel(%arg0: i32, %arg1: memref<8x1568xbf16, #tpu.memory_space<vmem>>, %arg2: memref<1568x256xbf16, #tpu.memory_space<vmem>>, %arg3: memref<1x256xf32, #tpu.memory_space<vmem>>, %arg4: memref<256x128xbf16, #tpu.memory_space<vmem>>, %arg5: memref<1x128xf32, #tpu.memory_space<vmem>>, %arg6: memref<128x128xbf16, #tpu.memory_space<vmem>>, %arg7: memref<1x128xf32, #tpu.memory_space<vmem>>, %arg8: memref<128x1568xbf16, #tpu.memory_space<vmem>>, %arg9: memref<8x1568xbf16, #tpu.memory_space<vmem>>) attributes {dimension_semantics = [#tpu.dimension_semantics<parallel>], iteration_bounds = array<i64: 1>, scalar_prefetch = 0 : i64, scratch_operands = 0 : i64, tpu.core_type = #tpu.core_type<tc>, window_params = [{transform_indices = @transform_0, window_bounds = array<i64: 8, 1568>}, {pipeline_mode = #tpu.pipeline_mode<synchronous>, transform_indices = @transform_1, window_bounds = array<i64: 1568, 256>}, {pipeline_mode = #tpu.pipeline_mode<synchronous>, transform_indices = @transform_2, window_bounds = array<i64: 1, 256>}, {pipeline_mode = #tpu.pipeline_mode<synchronous>, transform_indices = @transform_3, window_bounds = array<i64: 256, 128>}, {pipeline_mode = #tpu.pipeline_mode<synchronous>, transform_indices = @transform_4, window_bounds = array<i64: 1, 128>}, {pipeline_mode = #tpu.pipeline_mode<synchronous>, transform_indices = @transform_5, window_bounds = array<i64: 128, 128>}, {pipeline_mode = #tpu.pipeline_mode<synchronous>, transform_indices = @transform_6, window_bounds = array<i64: 1, 128>}, {pipeline_mode = #tpu.pipeline_mode<synchronous>, transform_indices = @transform_7, window_bounds = array<i64: 128, 1568>}, {transform_indices = @transform_8, window_bounds = array<i64: 8, 1568>}]} {
    %c0 = arith.constant 0 : index
    %c0_0 = arith.constant 0 : index
    %0 = vector.load %arg1[%c0, %c0_0] : memref<8x1568xbf16, #tpu.memory_space<vmem>>, vector<8x1568xbf16>
    %c0_1 = arith.constant 0 : index
    %c0_2 = arith.constant 0 : index
    %1 = vector.load %arg2[%c0_1, %c0_2] : memref<1568x256xbf16, #tpu.memory_space<vmem>>, vector<1568x256xbf16>
    %cst = arith.constant dense<0.000000e+00> : vector<8x256xf32>
    %2 = tpu.matmul %0, %1, %cst {dimension_numbers = #tpu.dot_dimension_numbers<[1], [0], [0], [1], [0, 0, 1, 1], [], []>} : vector<8x1568xbf16>, vector<1568x256xbf16>, vector<8x256xf32> -> vector<8x256xf32>
    %c0_3 = arith.constant 0 : index
    %c0_4 = arith.constant 0 : index
    %3 = vector.load %arg3[%c0_3, %c0_4] : memref<1x256xf32, #tpu.memory_space<vmem>>, vector<1x256xf32>
    %4 = vector.broadcast %3 : vector<1x256xf32> to vector<8x256xf32>
    %5 = arith.addf %2, %4 : vector<8x256xf32>
    %cst_5 = arith.constant 0.000000e+00 : f32
    %6 = vector.broadcast %cst_5 : f32 to vector<8x256xf32>
    %7 = arith.maximumf %5, %6 : vector<8x256xf32>
    %8 = arith.truncf %7 : vector<8x256xf32> to vector<8x256xbf16>
    %c0_6 = arith.constant 0 : index
    %c0_7 = arith.constant 0 : index
    %9 = vector.load %arg4[%c0_6, %c0_7] : memref<256x128xbf16, #tpu.memory_space<vmem>>, vector<256x128xbf16>
    %cst_8 = arith.constant dense<0.000000e+00> : vector<8x128xf32>
    %10 = tpu.matmul %8, %9, %cst_8 {dimension_numbers = #tpu.dot_dimension_numbers<[1], [0], [0], [1], [0, 0, 1, 1], [], []>} : vector<8x256xbf16>, vector<256x128xbf16>, vector<8x128xf32> -> vector<8x128xf32>
    %c0_9 = arith.constant 0 : index
    %c0_10 = arith.constant 0 : index
    %11 = vector.load %arg5[%c0_9, %c0_10] : memref<1x128xf32, #tpu.memory_space<vmem>>, vector<1x128xf32>
    %12 = vector.broadcast %11 : vector<1x128xf32> to vector<8x128xf32>
    %13 = arith.addf %10, %12 : vector<8x128xf32>
    %cst_11 = arith.constant 0.000000e+00 : f32
    %14 = vector.broadcast %cst_11 : f32 to vector<8x128xf32>
    %15 = arith.maximumf %13, %14 : vector<8x128xf32>
    %16 = arith.truncf %15 : vector<8x128xf32> to vector<8x128xbf16>
    %c0_12 = arith.constant 0 : index
    %c0_13 = arith.constant 0 : index
    %17 = vector.load %arg6[%c0_12, %c0_13] : memref<128x128xbf16, #tpu.memory_space<vmem>>, vector<128x128xbf16>
    %cst_14 = arith.constant dense<0.000000e+00> : vector<8x128xf32>
    %18 = tpu.matmul %16, %17, %cst_14 {dimension_numbers = #tpu.dot_dimension_numbers<[1], [0], [0], [1], [0, 0, 1, 1], [], []>} : vector<8x128xbf16>, vector<128x128xbf16>, vector<8x128xf32> -> vector<8x128xf32>
    %c0_15 = arith.constant 0 : index
    %c0_16 = arith.constant 0 : index
    %19 = vector.load %arg7[%c0_15, %c0_16] : memref<1x128xf32, #tpu.memory_space<vmem>>, vector<1x128xf32>
    %20 = vector.broadcast %19 : vector<1x128xf32> to vector<8x128xf32>
    %21 = arith.addf %18, %20 : vector<8x128xf32>
    %22 = arith.negf %21 : vector<8x128xf32>
    %23 = math.exp %22 : vector<8x128xf32>
    %cst_17 = arith.constant 1.000000e+00 : f32
    %24 = vector.broadcast %cst_17 : f32 to vector<8x128xf32>
    %25 = arith.addf %24, %23 : vector<8x128xf32>
    %26 = arith.divf %24, %25 : vector<8x128xf32>
    %27 = arith.truncf %26 : vector<8x128xf32> to vector<8x128xbf16>
    %c0_18 = arith.constant 0 : index
    %c0_19 = arith.constant 0 : index
    %28 = vector.load %arg8[%c0_18, %c0_19] : memref<128x1568xbf16, #tpu.memory_space<vmem>>, vector<128x1568xbf16>
    %cst_20 = arith.constant dense<0.000000e+00> : vector<8x1568xf32>
    %29 = tpu.matmul %27, %28, %cst_20 {dimension_numbers = #tpu.dot_dimension_numbers<[1], [0], [0], [1], [0, 0, 1, 1], [], []>} : vector<8x128xbf16>, vector<128x1568xbf16>, vector<8x1568xf32> -> vector<8x1568xf32>
    %30 = arith.truncf %29 : vector<8x1568xf32> to vector<8x1568xbf16>
    %c0_21 = arith.constant 0 : index
    %c0_22 = arith.constant 0 : index
    %31 = vector.load %arg9[%c0_21, %c0_22] : memref<8x1568xbf16, #tpu.memory_space<vmem>>, vector<8x1568xbf16>
    tpu.vector_store %arg9[%c0_21, %c0_22], %30 {strides = array<i32>} : memref<8x1568xbf16, #tpu.memory_space<vmem>>, vector<8x1568xbf16>,
    return
  }
  func.func @transform_0(%arg0: i32) -> (i32, i32) {
    %c0_i32 = arith.constant 0 : i32
    %c0_i32_0 = arith.constant 0 : i32
    return %arg0, %c0_i32 : i32, i32
  }
  func.func @transform_1(%arg0: i32) -> (i32, i32) {
    %c0_i32 = arith.constant 0 : i32
    %c0_i32_0 = arith.constant 0 : i32
    %c0_i32_1 = arith.constant 0 : i32
    return %c0_i32, %c0_i32_0 : i32, i32
  }
  func.func @transform_2(%arg0: i32) -> (i32, i32) {
    %c0_i32 = arith.constant 0 : i32
    %c0_i32_0 = arith.constant 0 : i32
    %c0_i32_1 = arith.constant 0 : i32
    return %c0_i32, %c0_i32_0 : i32, i32
  }
  func.func @transform_3(%arg0: i32) -> (i32, i32) {
    %c0_i32 = arith.constant 0 : i32
    %c0_i32_0 = arith.constant 0 : i32
    %c0_i32_1 = arith.constant 0 : i32
    return %c0_i32, %c0_i32_0 : i32, i32
  }
  func.func @transform_4(%arg0: i32) -> (i32, i32) {
    %c0_i32 = arith.constant 0 : i32
    %c0_i32_0 = arith.constant 0 : i32
    %c0_i32_1 = arith.constant 0 : i32
    return %c0_i32, %c0_i32_0 : i32, i32
  }
  func.func @transform_5(%arg0: i32) -> (i32, i32) {
    %c0_i32 = arith.constant 0 : i32
    %c0_i32_0 = arith.constant 0 : i32
    %c0_i32_1 = arith.constant 0 : i32
    return %c0_i32, %c0_i32_0 : i32, i32
  }
  func.func @transform_6(%arg0: i32) -> (i32, i32) {
    %c0_i32 = arith.constant 0 : i32
    %c0_i32_0 = arith.constant 0 : i32
    %c0_i32_1 = arith.constant 0 : i32
    return %c0_i32, %c0_i32_0 : i32, i32
  }
  func.func @transform_7(%arg0: i32) -> (i32, i32) {
    %c0_i32 = arith.constant 0 : i32
    %c0_i32_0 = arith.constant 0 : i32
    %c0_i32_1 = arith.constant 0 : i32
    return %c0_i32, %c0_i32_0 : i32, i32
  }
  func.func @transform_8(%arg0: i32) -> (i32, i32) {
    %c0_i32 = arith.constant 0 : i32
    %c0_i32_0 = arith.constant 0 : i32
    return %arg0, %c0_i32 : i32, i32
  }
}

</mosaic_0001>

<llo_original>
// kernel: tpu_custom_call.1
$region0: #{tpu_custom_call.1}
  #allocation0 [shape = 'u32[]', space=smem, size = 0x4, offset = 0x4, fixed_abs, tag = 'smem constant byte address 0x4 - core index']
  #allocation1 [shape = 'u32[144,128]{1,0:T(1,128)}', space=vmem, size = 0x12000, scoped, tag = 'internal scratch']
  %s0 = inlined_call_operand.hbm [shape: bf16[8,1568], index: 0, kind: input, shape index: {}]
  %s1 = inlined_call_operand.vmem [shape: bf16[1568,256], index: 1, kind: input, shape index: {}]
  %s2 = inlined_call_operand.vmem [shape: f32[1,256], index: 2, kind: input, shape index: {}]
  %s3 = inlined_call_operand.hbm [shape: bf16[256,128], index: 3, kind: input, shape index: {}]
  %s4 = inlined_call_operand.hbm [shape: f32[1,128], index: 4, kind: input, shape index: {}]
  %s5 = inlined_call_operand.vmem [shape: bf16[128,128], index: 5, kind: input, shape index: {}]
  %s6 = inlined_call_operand.hbm [shape: f32[1,128], index: 6, kind: input, shape index: {}]
  %s7 = inlined_call_operand.vmem [shape: bf16[128,1568], index: 7, kind: input, shape index: {}]
  %s8 = inlined_call_operand.hbm [shape: bf16[8,1568], index: 8, kind: output, shape index: {}]
  %s9 = sld [smem:[#allocation0]]
  $region58: #{tpu_custom_call.1} parent=0
    _
  %s11 = ssub.s32 1, %s9
  %s12 = scalar_select 0, %s11, %s9
  $region1: #{tpu_custom_call.1} parent=0
    #allocation2 [shape = 'u8[26624]{0}', space=vmem, size = 0x6800, scoped, tag = 'input window, operand 0, single buffered']
    #allocation3 [shape = 's32[1]{0}', space=sflag, size = 0x4, scoped, tag = 'scoped memory for tpu_custom_call.1']
    #allocation4 [shape = 's32[1]{0}', space=sflag, size = 0x4, scoped, tag = 'scoped memory for tpu_custom_call.1']
    #allocation5 [shape = 'u8[65536]{0}', space=vmem, size = 0x10000, scoped, tag = 'input window, operand 3, single buffered']
    #allocation6 [shape = 's32[1]{0}', space=sflag, size = 0x4, scoped, tag = 'scoped memory for tpu_custom_call.1']
    #allocation7 [shape = 'u8[512]{0}', space=vmem, size = 0x400, scoped, tag = 'input window, operand 4, single buffered']
    #allocation8 [shape = 'u8[512]{0}', space=vmem, size = 0x400, scoped, tag = 'input window, operand 6, single buffered']
    #allocation9 [shape = 's32[1]{0}', space=sflag, size = 0x4, scoped, tag = 'scoped memory for tpu_custom_call.1']
    #allocation10 [shape = 'u8[26624]{0}', space=vmem, size = 0x6800, scoped, tag = 'output window, operand 0, single buffered']
    %13 = vsyncpa [#allocation3], 0
    %14 = vsyncpa [#allocation6], 0
    %15 = vsyncpa [#allocation9], 0
    %16 = vsyncpa [#allocation4], 0
    // Predicated region
    $region2: #{tpu_custom_call.1} parent=1 // pred_check
      _
    $region3: #{tpu_custom_call.1} parent=1 // pred_check_branch
      %18 = sbr.rel (0) target = $region5
    $region4: #{tpu_custom_call.1} parent=1 // pred_region
      %s20 = ssub.s32 832, 832
      %21 = vsyncadd [#allocation3], %s20
      %s23 = sshll.u32 [#allocation2], 4
      %s24 = int_to_ptr.vmem [resolvable:$true] %s23
      %26 = dma.hbm_to_vmem [thread:$0]  %s0, 832, %s24, [#allocation3]
    $region5: #{tpu_custom_call.1} parent=1 // pred_fallthru
      _
    // Predicated region
    $region6: #{tpu_custom_call.1} parent=1 // pred_check
      _
    $region7: #{tpu_custom_call.1} parent=1 // pred_check_branch
      %28 = sbr.rel (0) target = $region9
    $region8: #{tpu_custom_call.1} parent=1 // pred_region
      _
    $region9: #{tpu_custom_call.1} parent=1 // pred_fallthru
      _
    // Predicated region
    $region10: #{tpu_custom_call.1} parent=1 // pred_check
      _
    $region11: #{tpu_custom_call.1} parent=1 // pred_check_branch
      %30 = sbr.rel (0) target = $region13
    $region12: #{tpu_custom_call.1} parent=1 // pred_region
      _
    $region13: #{tpu_custom_call.1} parent=1 // pred_fallthru
      _
    // Predicated region
    $region14: #{tpu_custom_call.1} parent=1 // pred_check
      _
    $region15: #{tpu_custom_call.1} parent=1 // pred_check_branch
      %32 = sbr.rel (0) target = $region17
    $region16: #{tpu_custom_call.1} parent=1 // pred_region
      %s34 = ssub.s32 2048, 2048
      %35 = vsyncadd [#allocation6], %s34
      %s36 = sshll.u32 [#allocation5], 4
      %s37 = int_to_ptr.vmem [resolvable:$true] %s36
      %42 = dma.hbm_to_vmem [thread:$0]  %s3, 2048, %s37, [#allocation6], 64, 64, 4
    $region17: #{tpu_custom_call.1} parent=1 // pred_fallthru
      _
    // Predicated region
    $region18: #{tpu_custom_call.1} parent=1 // pred_check
      _
    $region19: #{tpu_custom_call.1} parent=1 // pred_check_branch
      %44 = sbr.rel (0) target = $region21
    $region20: #{tpu_custom_call.1} parent=1 // pred_region
      %s46 = ssub.s32 16, 16
      %47 = vsyncadd [#allocation6], %s46
      %s49 = sshll.u32 [#allocation7], 4
      %s50 = int_to_ptr.vmem [resolvable:$true] %s49
      %52 = dma.hbm_to_vmem [thread:$0]  %s4, 16, %s50, [#allocation6]
    $region21: #{tpu_custom_call.1} parent=1 // pred_fallthru
      _
    // Predicated region
    $region22: #{tpu_custom_call.1} parent=1 // pred_check
      _
    $region23: #{tpu_custom_call.1} parent=1 // pred_check_branch
      %54 = sbr.rel (0) target = $region25
    $region24: #{tpu_custom_call.1} parent=1 // pred_region
      _
    $region25: #{tpu_custom_call.1} parent=1 // pred_fallthru
      _
    // Predicated region
    $region26: #{tpu_custom_call.1} parent=1 // pred_check
      _
    $region27: #{tpu_custom_call.1} parent=1 // pred_check_branch
      %56 = sbr.rel (0) target = $region29
    $region28: #{tpu_custom_call.1} parent=1 // pred_region
      %s58 = ssub.s32 16, 16
      %59 = vsyncadd [#allocation9], %s58
      %s61 = sshll.u32 [#allocation8], 4
      %s62 = int_to_ptr.vmem [resolvable:$true] %s61
      %64 = dma.hbm_to_vmem [thread:$0]  %s6, 16, %s62, [#allocation9]
    $region29: #{tpu_custom_call.1} parent=1 // pred_fallthru
      _
    // Predicated region
    $region30: #{tpu_custom_call.1} parent=1 // pred_check
      _
    $region31: #{tpu_custom_call.1} parent=1 // pred_check_branch
      %66 = sbr.rel (0) target = $region33
    $region32: #{tpu_custom_call.1} parent=1 // pred_region
      _
    $region33: #{tpu_custom_call.1} parent=1 // pred_fallthru
      _
    // Predicated region
    $region34: #{tpu_custom_call.1} parent=1 // pred_check
      _
    $region35: #{tpu_custom_call.1} parent=1 // pred_check_branch
      %68 = sbr.rel (0) target = $region37
    $region36: #{tpu_custom_call.1} parent=1 // pred_region
      %69 = dma.done [#allocation3], 832
    $region37: #{tpu_custom_call.1} parent=1 // pred_fallthru
      _
    // Predicated region
    $region38: #{tpu_custom_call.1} parent=1 // pred_check
      _
    $region39: #{tpu_custom_call.1} parent=1 // pred_check_branch
      %71 = sbr.rel (0) target = $region41
    $region40: #{tpu_custom_call.1} parent=1 // pred_region
      %72 = dma.done [#allocation6], 2048
    $region41: #{tpu_custom_call.1} parent=1 // pred_fallthru
      _
    // Predicated region
    $region42: #{tpu_custom_call.1} parent=1 // pred_check
      _
    $region43: #{tpu_custom_call.1} parent=1 // pred_check_branch
      %74 = sbr.rel (0) target = $region45
    $region44: #{tpu_custom_call.1} parent=1 // pred_region
      %75 = dma.done [#allocation6], 16
    $region45: #{tpu_custom_call.1} parent=1 // pred_fallthru
      _
    // Predicated region
    $region46: #{tpu_custom_call.1} parent=1 // pred_check
      _
    $region47: #{tpu_custom_call.1} parent=1 // pred_check_branch
      %77 = sbr.rel (0) target = $region49
    $region48: #{tpu_custom_call.1} parent=1 // pred_region
      %78 = dma.done [#allocation9], 16
    $region49: #{tpu_custom_call.1} parent=1 // pred_fallthru
      _
    %v80 = vld [vmem:[#allocation2] sm:$0xff]
    %v81 = vld [vmem:[#allocation2 + $0x8] sm:$0xff]
    %v82 = vld [vmem:[#allocation2 + $0x10] sm:$0xff]
    %v83 = vld [vmem:[#allocation2 + $0x18] sm:$0xff]
    %v84 = vld [vmem:[#allocation2 + $0x20] sm:$0xff]
    %v85 = vld [vmem:[#allocation2 + $0x28] sm:$0xff]
    %v86 = vld [vmem:[#allocation2 + $0x30] sm:$0xf]
    %v87 = vld [vmem:[%s1] sm:$0xff]
    %v88 = vld [vmem:[%s1 + $0x8] sm:$0xff]
    %v89 = vld [vmem:[%s1 + $0x10] sm:$0xff]
    %v90 = vld [vmem:[%s1 + $0x18] sm:$0xff]
    %v91 = vld [vmem:[%s1 + $0x20] sm:$0xff]
    %v92 = vld [vmem:[%s1 + $0x28] sm:$0xff]
    %v93 = vld [vmem:[%s1 + $0x30] sm:$0xff]
    %v94 = vld [vmem:[%s1 + $0x38] sm:$0xff]
    %v95 = vld [vmem:[%s1 + $0x40] sm:$0xff]
    %v96 = vld [vmem:[%s1 + $0x48] sm:$0xff]
    %v97 = vld [vmem:[%s1 + $0x50] sm:$0xff]
    %v98 = vld [vmem:[%s1 + $0x58] sm:$0xff]
    %v99 = vld [vmem:[%s1 + $0x60] sm:$0xff]
    %v100 = vld [vmem:[%s1 + $0x68] sm:$0xff]
    %v101 = vld [vmem:[%s1 + $0x70] sm:$0xff]
    %v102 = vld [vmem:[%s1 + $0x78] sm:$0xff]
    %v103 = vld [vmem:[%s1 + $0x80] sm:$0xff]
    %v104 = vld [vmem:[%s1 + $0x88] sm:$0xff]
    %v105 = vld [vmem:[%s1 + $0x90] sm:$0xff]
    %v106 = vld [vmem:[%s1 + $0x98] sm:$0xff]
    %v107 = vld [vmem:[%s1 + $0xa0] sm:$0xff]
    %v108 = vld [vmem:[%s1 + $0xa8] sm:$0xff]
    %v109 = vld [vmem:[%s1 + $0xb0] sm:$0xff]
    %v110 = vld [vmem:[%s1 + $0xb8] sm:$0xff]
    %v111 = vld [vmem:[%s1 + $0xc0] sm:$0xff]
    %v112 = vld [vmem:[%s1 + $0xc8] sm:$0xff]
    %v113 = vld [vmem:[%s1 + $0xd0] sm:$0xff]
    %v114 = vld [vmem:[%s1 + $0xd8] sm:$0xff]
    %v115 = vld [vmem:[%s1 + $0xe0] sm:$0xff]
    %v116 = vld [vmem:[%s1 + $0xe8] sm:$0xff]
    %v117 = vld [vmem:[%s1 + $0xf0] sm:$0xff]
    %v118 = vld [vmem:[%s1 + $0xf8] sm:$0xff]
    %v119 = vld [vmem:[%s1 + $0x100] sm:$0xff]
    %v120 = vld [vmem:[%s1 + $0x108] sm:$0xff]
    %v121 = vld [vmem:[%s1 + $0x110] sm:$0xff]
    %v122 = vld [vmem:[%s1 + $0x118] sm:$0xff]
    %v123 = vld [vmem:[%s1 + $0x120] sm:$0xff]
    %v124 = vld [vmem:[%s1 + $0x128] sm:$0xff]
    %v125 = vld [vmem:[%s1 + $0x130] sm:$0xff]
    %v126 = vld [vmem:[%s1 + $0x138] sm:$0xff]
    %v127 = vld [vmem:[%s1 + $0x140] sm:$0xff]
    %v128 = vld [vmem:[%s1 + $0x148] sm:$0xff]
    %v129 = vld [vmem:[%s1 + $0x150] sm:$0xff]
    %v130 = vld [vmem:[%s1 + $0x158] sm:$0xff]
    %v131 = vld [vmem:[%s1 + $0x160] sm:$0xff]
    %v132 = vld [vmem:[%s1 + $0x168] sm:$0xff]
    %v133 = vld [vmem:[%s1 + $0x170] sm:$0xff]
    %v134 = vld [vmem:[%s1 + $0x178] sm:$0xff]
    %v135 = vld [vmem:[%s1 + $0x180] sm:$0xff]
    %v136 = vld [vmem:[%s1 + $0x188] sm:$0xff]
    %v137 = vld [vmem:[%s1 + $0x190] sm:$0xff]
    %v138 = vld [vmem:[%s1 + $0x198] sm:$0xff]
    %v139 = vld [vmem:[%s1 + $0x1a0] sm:$0xff]
    %v140 = vld [vmem:[%s1 + $0x1a8] sm:$0xff]
    %v141 = vld [vmem:[%s1 + $0x1b0] sm:$0xff]
    %v142 = vld [vmem:[%s1 + $0x1b8] sm:$0xff]
    %v143 = vld [vmem:[%s1 + $0x1c0] sm:$0xff]
    %v144 = vld [vmem:[%s1 + $0x1c8] sm:$0xff]
    %v145 = vld [vmem:[%s1 + $0x1d0] sm:$0xff]
    %v146 = vld [vmem:[%s1 + $0x1d8] sm:$0xff]
    %v147 = vld [vmem:[%s1 + $0x1e0] sm:$0xff]
    %v148 = vld [vmem:[%s1 + $0x1e8] sm:$0xff]
    %v149 = vld [vmem:[%s1 + $0x1f0] sm:$0xff]
    %v150 = vld [vmem:[%s1 + $0x1f8] sm:$0xff]
    %v151 = vld [vmem:[%s1 + $0x200] sm:$0xff]
    %v152 = vld [vmem:[%s1 + $0x208] sm:$0xff]
    %v153 = vld [vmem:[%s1 + $0x210] sm:$0xff]
    %v154 = vld [vmem:[%s1 + $0x218] sm:$0xff]
    %v155 = vld [vmem:[%s1 + $0x220] sm:$0xff]
    %v156 = vld [vmem:[%s1 + $0x228] sm:$0xff]
    %v157 = vld [vmem:[%s1 + $0x230] sm:$0xff]
    %v158 = vld [vmem:[%s1 + $0x238] sm:$0xff]
    %v159 = vld [vmem:[%s1 + $0x240] sm:$0xff]
    %v160 = vld [vmem:[%s1 + $0x248] sm:$0xff]
    %v161 = vld [vmem:[%s1 + $0x250] sm:$0xff]
    %v162 = vld [vmem:[%s1 + $0x258] sm:$0xff]
    %v163 = vld [vmem:[%s1 + $0x260] sm:$0xff]
    %v164 = vld [vmem:[%s1 + $0x268] sm:$0xff]
    %v165 = vld [vmem:[%s1 + $0x270] sm:$0xff]
    %v166 = vld [vmem:[%s1 + $0x278] sm:$0xff]
    %v167 = vld [vmem:[%s1 + $0x280] sm:$0xff]
    %v168 = vld [vmem:[%s1 + $0x288] sm:$0xff]
    %v169 = vld [vmem:[%s1 + $0x290] sm:$0xff]
    %v170 = vld [vmem:[%s1 + $0x298] sm:$0xff]
    %v171 = vld [vmem:[%s1 + $0x2a0] sm:$0xff]
    %v172 = vld [vmem:[%s1 + $0x2a8] sm:$0xff]
    %v173 = vld [vmem:[%s1 + $0x2b0] sm:$0xff]
    %v174 = vld [vmem:[%s1 + $0x2b8] sm:$0xff]
    %v175 = vld [vmem:[%s1 + $0x2c0] sm:$0xff]
    %v176 = vld [vmem:[%s1 + $0x2c8] sm:$0xff]
    %v177 = vld [vmem:[%s1 + $0x2d0] sm:$0xff]
    %v178 = vld [vmem:[%s1 + $0x2d8] sm:$0xff]
    %v179 = vld [vmem:[%s1 + $0x2e0] sm:$0xff]
    %v180 = vld [vmem:[%s1 + $0x2e8] sm:$0xff]
    %v181 = vld [vmem:[%s1 + $0x2f0] sm:$0xff]
    %v182 = vld [vmem:[%s1 + $0x2f8] sm:$0xff]
    %v183 = vld [vmem:[%s1 + $0x300] sm:$0xff]
    %v184 = vld [vmem:[%s1 + $0x308] sm:$0xff]
    %v185 = vld [vmem:[%s1 + $0x310] sm:$0xff]
    %v186 = vld [vmem:[%s1 + $0x318] sm:$0xff]
    %v187 = vld [vmem:[%s1 + $0x320] sm:$0xff]
    %v188 = vld [vmem:[%s1 + $0x328] sm:$0xff]
    %v189 = vld [vmem:[%s1 + $0x330] sm:$0xff]
    %v190 = vld [vmem:[%s1 + $0x338] sm:$0xff]
    %v191 = vld [vmem:[%s1 + $0x340] sm:$0xff]
    %v192 = vld [vmem:[%s1 + $0x348] sm:$0xff]
    %v193 = vld [vmem:[%s1 + $0x350] sm:$0xff]
    %v194 = vld [vmem:[%s1 + $0x358] sm:$0xff]
    %v195 = vld [vmem:[%s1 + $0x360] sm:$0xff]
    %v196 = vld [vmem:[%s1 + $0x368] sm:$0xff]
    %v197 = vld [vmem:[%s1 + $0x370] sm:$0xff]
    %v198 = vld [vmem:[%s1 + $0x378] sm:$0xff]
    %v199 = vld [vmem:[%s1 + $0x380] sm:$0xff]
    %v200 = vld [vmem:[%s1 + $0x388] sm:$0xff]
    %v201 = vld [vmem:[%s1 + $0x390] sm:$0xff]
    %v202 = vld [vmem:[%s1 + $0x398] sm:$0xff]
    %v203 = vld [vmem:[%s1 + $0x3a0] sm:$0xff]
    %v204 = vld [vmem:[%s1 + $0x3a8] sm:$0xff]
    %v205 = vld [vmem:[%s1 + $0x3b0] sm:$0xff]
    %v206 = vld [vmem:[%s1 + $0x3b8] sm:$0xff]
    %v207 = vld [vmem:[%s1 + $0x3c0] sm:$0xff]
    %v208 = vld [vmem:[%s1 + $0x3c8] sm:$0xff]
    %v209 = vld [vmem:[%s1 + $0x3d0] sm:$0xff]
    %v210 = vld [vmem:[%s1 + $0x3d8] sm:$0xff]
    %v211 = vld [vmem:[%s1 + $0x3e0] sm:$0xff]
    %v212 = vld [vmem:[%s1 + $0x3e8] sm:$0xff]
    %v213 = vld [vmem:[%s1 + $0x3f0] sm:$0xff]
    %v214 = vld [vmem:[%s1 + $0x3f8] sm:$0xff]
    %v215 = vld [vmem:[%s1 + $0x400] sm:$0xff]
    %v216 = vld [vmem:[%s1 + $0x408] sm:$0xff]
    %v217 = vld [vmem:[%s1 + $0x410] sm:$0xff]
    %v218 = vld [vmem:[%s1 + $0x418] sm:$0xff]
    %v219 = vld [vmem:[%s1 + $0x420] sm:$0xff]
    %v220 = vld [vmem:[%s1 + $0x428] sm:$0xff]
    %v221 = vld [vmem:[%s1 + $0x430] sm:$0xff]
    %v222 = vld [vmem:[%s1 + $0x438] sm:$0xff]
    %v223 = vld [vmem:[%s1 + $0x440] sm:$0xff]
    %v224 = vld [vmem:[%s1 + $0x448] sm:$0xff]
    %v225 = vld [vmem:[%s1 + $0x450] sm:$0xff]
    %v226 = vld [vmem:[%s1 + $0x458] sm:$0xff]
    %v227 = vld [vmem:[%s1 + $0x460] sm:$0xff]
    %v228 = vld [vmem:[%s1 + $0x468] sm:$0xff]
    %v229 = vld [vmem:[%s1 + $0x470] sm:$0xff]
    %v230 = vld [vmem:[%s1 + $0x478] sm:$0xff]
    %v231 = vld [vmem:[%s1 + $0x480] sm:$0xff]
    %v232 = vld [vmem:[%s1 + $0x488] sm:$0xff]
    %v233 = vld [vmem:[%s1 + $0x490] sm:$0xff]
    %v234 = vld [vmem:[%s1 + $0x498] sm:$0xff]
    %v235 = vld [vmem:[%s1 + $0x4a0] sm:$0xff]
    %v236 = vld [vmem:[%s1 + $0x4a8] sm:$0xff]
    %v237 = vld [vmem:[%s1 + $0x4b0] sm:$0xff]
    %v238 = vld [vmem:[%s1 + $0x4b8] sm:$0xff]
    %v239 = vld [vmem:[%s1 + $0x4c0] sm:$0xff]
    %v240 = vld [vmem:[%s1 + $0x4c8] sm:$0xff]
    %v241 = vld [vmem:[%s1 + $0x4d0] sm:$0xff]
    %v242 = vld [vmem:[%s1 + $0x4d8] sm:$0xff]
    %v243 = vld [vmem:[%s1 + $0x4e0] sm:$0xff]
    %v244 = vld [vmem:[%s1 + $0x4e8] sm:$0xff]
    %v245 = vld [vmem:[%s1 + $0x4f0] sm:$0xff]
    %v246 = vld [vmem:[%s1 + $0x4f8] sm:$0xff]
    %v247 = vld [vmem:[%s1 + $0x500] sm:$0xff]
    %v248 = vld [vmem:[%s1 + $0x508] sm:$0xff]
    %v249 = vld [vmem:[%s1 + $0x510] sm:$0xff]
    %v250 = vld [vmem:[%s1 + $0x518] sm:$0xff]
    %v251 = vld [vmem:[%s1 + $0x520] sm:$0xff]
    %v252 = vld [vmem:[%s1 + $0x528] sm:$0xff]
    %v253 = vld [vmem:[%s1 + $0x530] sm:$0xff]
    %v254 = vld [vmem:[%s1 + $0x538] sm:$0xff]
    %v255 = vld [vmem:[%s1 + $0x540] sm:$0xff]
    %v256 = vld [vmem:[%s1 + $0x548] sm:$0xff]
    %v257 = vld [vmem:[%s1 + $0x550] sm:$0xff]
    %v258 = vld [vmem:[%s1 + $0x558] sm:$0xff]
    %v259 = vld [vmem:[%s1 + $0x560] sm:$0xff]
    %v260 = vld [vmem:[%s1 + $0x568] sm:$0xff]
    %v261 = vld [vmem:[%s1 + $0x570] sm:$0xff]
    %v262 = vld [vmem:[%s1 + $0x578] sm:$0xff]
    %v263 = vld [vmem:[%s1 + $0x580] sm:$0xff]
    %v264 = vld [vmem:[%s1 + $0x588] sm:$0xff]
    %v265 = vld [vmem:[%s1 + $0x590] sm:$0xff]
    %v266 = vld [vmem:[%s1 + $0x598] sm:$0xff]
    %v267 = vld [vmem:[%s1 + $0x5a0] sm:$0xff]
    %v268 = vld [vmem:[%s1 + $0x5a8] sm:$0xff]
    %v269 = vld [vmem:[%s1 + $0x5b0] sm:$0xff]
    %v270 = vld [vmem:[%s1 + $0x5b8] sm:$0xff]
    %v271 = vld [vmem:[%s1 + $0x5c0] sm:$0xff]
    %v272 = vld [vmem:[%s1 + $0x5c8] sm:$0xff]
    %v273 = vld [vmem:[%s1 + $0x5d0] sm:$0xff]
    %v274 = vld [vmem:[%s1 + $0x5d8] sm:$0xff]
    %v275 = vld [vmem:[%s1 + $0x5e0] sm:$0xff]
    %v276 = vld [vmem:[%s1 + $0x5e8] sm:$0xff]
    %v277 = vld [vmem:[%s1 + $0x5f0] sm:$0xff]
    %v278 = vld [vmem:[%s1 + $0x5f8] sm:$0xff]
    %v279 = vld [vmem:[%s1 + $0x600] sm:$0xff]
    %v280 = vld [vmem:[%s1 + $0x608] sm:$0xff]
    %v281 = vld [vmem:[%s1 + $0x610] sm:$0xff]
    %v282 = vld [vmem:[%s1 + $0x618] sm:$0xff]
    %v283 = vld [vmem:[%s2] sm:$0x3]
    %v285 = vlaneseq
    %v286 = vshrl.u32 %v285, 7
    %v287 = vsub.s32 0, %v286
    %v288 = vrot.slane %v283, %v287
    %v289 = vlaneseq
    %v290 = vshrl.u32 %v289, 7
    %v291 = vsub.s32 1, %v290
    %v292 = vrot.slane %v283, %v291
    %v302 = vunpack.c.l.b16 %v80
    %v303 = vunpack.c.h.b16 %v80
    %v304 = vunpack.c.l.b16 %v81
    %v305 = vunpack.c.h.b16 %v81
    %v306 = vunpack.c.l.b16 %v82
    %v307 = vunpack.c.h.b16 %v82
    %v308 = vunpack.c.l.b16 %v83
    %v309 = vunpack.c.h.b16 %v83
    %v310 = vunpack.c.l.b16 %v84
    %v311 = vunpack.c.h.b16 %v84
    %v312 = vunpack.c.l.b16 %v85
    %v313 = vunpack.c.h.b16 %v85
    %v314 = vunpack.c.l.b16 %v86
    %v315 = vpack.c.b16 %v302, %v302
    %v316 = vpack.c.b16 %v303, %v303
    %v317 = vpack.c.b16 %v304, %v304
    %v318 = vpack.c.b16 %v305, %v305
    %v319 = vpack.c.b16 %v306, %v306
    %v320 = vpack.c.b16 %v307, %v307
    %v321 = vpack.c.b16 %v308, %v308
    %v322 = vpack.c.b16 %v309, %v309
    %v323 = vpack.c.b16 %v310, %v310
    %v324 = vpack.c.b16 %v311, %v311
    %v325 = vpack.c.b16 %v312, %v312
    %v326 = vpack.c.b16 %v313, %v313
    %v327 = vpack.c.b16 %v314, %v314
    %v536 = vunpack.c.l.b16 %v87
    %v537 = vunpack.c.h.b16 %v87
    %v538 = vunpack.c.l.b16 %v88
    %v539 = vunpack.c.h.b16 %v88
    %v540 = vunpack.c.l.b16 %v89
    %v541 = vunpack.c.h.b16 %v89
    %v542 = vunpack.c.l.b16 %v90
    %v543 = vunpack.c.h.b16 %v90
    %v544 = vunpack.c.l.b16 %v91
    %v545 = vunpack.c.h.b16 %v91
    %v546 = vunpack.c.l.b16 %v92
    %v547 = vunpack.c.h.b16 %v92
    %v548 = vunpack.c.l.b16 %v93
    %v549 = vunpack.c.h.b16 %v93
    %v550 = vunpack.c.l.b16 %v94
    %v551 = vunpack.c.h.b16 %v94
    %v552 = vunpack.c.l.b16 %v95
    %v553 = vunpack.c.h.b16 %v95
    %v554 = vunpack.c.l.b16 %v96
    %v555 = vunpack.c.h.b16 %v96
    %v556 = vunpack.c.l.b16 %v97
    %v557 = vunpack.c.h.b16 %v97
    %v558 = vunpack.c.l.b16 %v98
    %v559 = vunpack.c.h.b16 %v98
    %v560 = vunpack.c.l.b16 %v99
    %v561 = vunpack.c.h.b16 %v99
    %v562 = vunpack.c.l.b16 %v100
    %v563 = vunpack.c.h.b16 %v100
    %v564 = vunpack.c.l.b16 %v101
    %v565 = vunpack.c.h.b16 %v101
    %v566 = vunpack.c.l.b16 %v102
    %v567 = vunpack.c.h.b16 %v102
    %v568 = vunpack.c.l.b16 %v103
    %v569 = vunpack.c.h.b16 %v103
    %v570 = vunpack.c.l.b16 %v104
    %v571 = vunpack.c.h.b16 %v104
    %v572 = vunpack.c.l.b16 %v105
    %v573 = vunpack.c.h.b16 %v105
    %v574 = vunpack.c.l.b16 %v106
    %v575 = vunpack.c.h.b16 %v106
    %v576 = vunpack.c.l.b16 %v107
    %v577 = vunpack.c.h.b16 %v107
    %v578 = vunpack.c.l.b16 %v108
    %v579 = vunpack.c.h.b16 %v108
    %v580 = vunpack.c.l.b16 %v109
    %v581 = vunpack.c.h.b16 %v109
    %v582 = vunpack.c.l.b16 %v110
    %v583 = vunpack.c.h.b16 %v110
    %v584 = vunpack.c.l.b16 %v111
    %v585 = vunpack.c.h.b16 %v111
    %v586 = vunpack.c.l.b16 %v112
    %v587 = vunpack.c.h.b16 %v112
    %v588 = vunpack.c.l.b16 %v113
    %v589 = vunpack.c.h.b16 %v113
    %v590 = vunpack.c.l.b16 %v114
    %v591 = vunpack.c.h.b16 %v114
    %v592 = vunpack.c.l.b16 %v115
    %v593 = vunpack.c.h.b16 %v115
    %v594 = vunpack.c.l.b16 %v116
    %v595 = vunpack.c.h.b16 %v116
    %v596 = vunpack.c.l.b16 %v117
    %v597 = vunpack.c.h.b16 %v117
    %v598 = vunpack.c.l.b16 %v118
    %v599 = vunpack.c.h.b16 %v118
    %v600 = vunpack.c.l.b16 %v119
    %v601 = vunpack.c.h.b16 %v119
    %v602 = vunpack.c.l.b16 %v120
    %v603 = vunpack.c.h.b16 %v120
    %v604 = vunpack.c.l.b16 %v121
    %v605 = vunpack.c.h.b16 %v121
    %v606 = vunpack.c.l.b16 %v122
    %v607 = vunpack.c.h.b16 %v122
    %v608 = vunpack.c.l.b16 %v123
    %v609 = vunpack.c.h.b16 %v123
    %v610 = vunpack.c.l.b16 %v124
    %v611 = vunpack.c.h.b16 %v124
    %v612 = vunpack.c.l.b16 %v125
    %v613 = vunpack.c.h.b16 %v125
    %v614 = vunpack.c.l.b16 %v126
    %v615 = vunpack.c.h.b16 %v126
    %v616 = vunpack.c.l.b16 %v127
    %v617 = vunpack.c.h.b16 %v127
    %v618 = vunpack.c.l.b16 %v128
    %v619 = vunpack.c.h.b16 %v128
    %v620 = vunpack.c.l.b16 %v129
    %v621 = vunpack.c.h.b16 %v129
    %v622 = vunpack.c.l.b16 %v130
    %v623 = vunpack.c.h.b16 %v130
    %v624 = vunpack.c.l.b16 %v131
    %v625 = vunpack.c.h.b16 %v131
    %v626 = vunpack.c.l.b16 %v132
    %v627 = vunpack.c.h.b16 %v132
    %v628 = vunpack.c.l.b16 %v133
    %v629 = vunpack.c.h.b16 %v133
    %v630 = vunpack.c.l.b16 %v134
    %v631 = vunpack.c.h.b16 %v134
    %v632 = vunpack.c.l.b16 %v135
    %v633 = vunpack.c.h.b16 %v135
    %v634 = vunpack.c.l.b16 %v136
    %v635 = vunpack.c.h.b16 %v136
    %v636 = vunpack.c.l.b16 %v137
    %v637 = vunpack.c.h.b16 %v137
    %v638 = vunpack.c.l.b16 %v138
    %v639 = vunpack.c.h.b16 %v138
    %v640 = vunpack.c.l.b16 %v139
    %v641 = vunpack.c.h.b16 %v139
    %v642 = vunpack.c.l.b16 %v140
    %v643 = vunpack.c.h.b16 %v140
    %v644 = vunpack.c.l.b16 %v141
    %v645 = vunpack.c.h.b16 %v141
    %v646 = vunpack.c.l.b16 %v142
    %v647 = vunpack.c.h.b16 %v142
    %v648 = vunpack.c.l.b16 %v143
    %v649 = vunpack.c.h.b16 %v143
    %v650 = vunpack.c.l.b16 %v144
    %v651 = vunpack.c.h.b16 %v144
    %v652 = vunpack.c.l.b16 %v145
    %v653 = vunpack.c.h.b16 %v145
    %v654 = vunpack.c.l.b16 %v146
    %v655 = vunpack.c.h.b16 %v146
    %v656 = vunpack.c.l.b16 %v147
    %v657 = vunpack.c.h.b16 %v147
    %v658 = vunpack.c.l.b16 %v148
    %v659 = vunpack.c.h.b16 %v148
    %v660 = vunpack.c.l.b16 %v149
    %v661 = vunpack.c.h.b16 %v149
    %v662 = vunpack.c.l.b16 %v150
    %v663 = vunpack.c.h.b16 %v150
    %v664 = vunpack.c.l.b16 %v151
    %v665 = vunpack.c.h.b16 %v151
    %v666 = vunpack.c.l.b16 %v152
    %v667 = vunpack.c.h.b16 %v152
    %v668 = vunpack.c.l.b16 %v153
    %v669 = vunpack.c.h.b16 %v153
    %v670 = vunpack.c.l.b16 %v154
    %v671 = vunpack.c.h.b16 %v154
    %v672 = vunpack.c.l.b16 %v155
    %v673 = vunpack.c.h.b16 %v155
    %v674 = vunpack.c.l.b16 %v156
    %v675 = vunpack.c.h.b16 %v156
    %v676 = vunpack.c.l.b16 %v157
    %v677 = vunpack.c.h.b16 %v157
    %v678 = vunpack.c.l.b16 %v158
    %v679 = vunpack.c.h.b16 %v158
    %v680 = vunpack.c.l.b16 %v159
    %v681 = vunpack.c.h.b16 %v159
    %v682 = vunpack.c.l.b16 %v160
    %v683 = vunpack.c.h.b16 %v160
    %v684 = vunpack.c.l.b16 %v161
    %v685 = vunpack.c.h.b16 %v161
    %v686 = vunpack.c.l.b16 %v162
    %v687 = vunpack.c.h.b16 %v162
    %v688 = vunpack.c.l.b16 %v163
    %v689 = vunpack.c.h.b16 %v163
    %v690 = vunpack.c.l.b16 %v164
    %v691 = vunpack.c.h.b16 %v164
    %v692 = vunpack.c.l.b16 %v165
    %v693 = vunpack.c.h.b16 %v165
    %v694 = vunpack.c.l.b16 %v166
    %v695 = vunpack.c.h.b16 %v166
    %v696 = vunpack.c.l.b16 %v167
    %v697 = vunpack.c.h.b16 %v167
    %v698 = vunpack.c.l.b16 %v168
    %v699 = vunpack.c.h.b16 %v168
    %v700 = vunpack.c.l.b16 %v169
    %v701 = vunpack.c.h.b16 %v169
    %v702 = vunpack.c.l.b16 %v170
    %v703 = vunpack.c.h.b16 %v170
    %v704 = vunpack.c.l.b16 %v171
    %v705 = vunpack.c.h.b16 %v171
    %v706 = vunpack.c.l.b16 %v172
    %v707 = vunpack.c.h.b16 %v172
    %v708 = vunpack.c.l.b16 %v173
    %v709 = vunpack.c.h.b16 %v173
    %v710 = vunpack.c.l.b16 %v174
    %v711 = vunpack.c.h.b16 %v174
    %v712 = vunpack.c.l.b16 %v175
    %v713 = vunpack.c.h.b16 %v175
    %v714 = vunpack.c.l.b16 %v176
    %v715 = vunpack.c.h.b16 %v176
    %v716 = vunpack.c.l.b16 %v177
    %v717 = vunpack.c.h.b16 %v177
    %v718 = vunpack.c.l.b16 %v178
    %v719 = vunpack.c.h.b16 %v178
    %v720 = vunpack.c.l.b16 %v179
    %v721 = vunpack.c.h.b16 %v179
    %v722 = vunpack.c.l.b16 %v180
    %v723 = vunpack.c.h.b16 %v180
    %v724 = vunpack.c.l.b16 %v181
    %v725 = vunpack.c.h.b16 %v181
    %v726 = vunpack.c.l.b16 %v182
    %v727 = vunpack.c.h.b16 %v182
    %v728 = vunpack.c.l.b16 %v183
    %v729 = vunpack.c.h.b16 %v183
    %v730 = vunpack.c.l.b16 %v184
    %v731 = vunpack.c.h.b16 %v184
    %v732 = vunpack.c.l.b16 %v185
    %v733 = vunpack.c.h.b16 %v185
    %v734 = vunpack.c.l.b16 %v186
    %v735 = vunpack.c.h.b16 %v186
    %v736 = vunpack.c.l.b16 %v187
    %v737 = vunpack.c.h.b16 %v187
    %v738 = vunpack.c.l.b16 %v188
    %v739 = vunpack.c.h.b16 %v188
    %v740 = vunpack.c.l.b16 %v189
    %v741 = vunpack.c.h.b16 %v189
    %v742 = vunpack.c.l.b16 %v190
    %v743 = vunpack.c.h.b16 %v190
    %v744 = vunpack.c.l.b16 %v191
    %v745 = vunpack.c.h.b16 %v191
    %v746 = vunpack.c.l.b16 %v192
    %v747 = vunpack.c.h.b16 %v192
    %v748 = vunpack.c.l.b16 %v193
    %v749 = vunpack.c.h.b16 %v193
    %v750 = vunpack.c.l.b16 %v194
    %v751 = vunpack.c.h.b16 %v194
    %v752 = vunpack.c.l.b16 %v195
    %v753 = vunpack.c.h.b16 %v195
    %v754 = vunpack.c.l.b16 %v196
    %v755 = vunpack.c.h.b16 %v196
    %v756 = vunpack.c.l.b16 %v197
    %v757 = vunpack.c.h.b16 %v197
    %v758 = vunpack.c.l.b16 %v198
    %v759 = vunpack.c.h.b16 %v198
    %v760 = vunpack.c.l.b16 %v199
    %v761 = vunpack.c.h.b16 %v199
    %v762 = vunpack.c.l.b16 %v200
    %v763 = vunpack.c.h.b16 %v200
    %v764 = vunpack.c.l.b16 %v201
    %v765 = vunpack.c.h.b16 %v201
    %v766 = vunpack.c.l.b16 %v202
    %v767 = vunpack.c.h.b16 %v202
    %v768 = vunpack.c.l.b16 %v203
    %v769 = vunpack.c.h.b16 %v203
    %v770 = vunpack.c.l.b16 %v204
    %v771 = vunpack.c.h.b16 %v204
    %v772 = vunpack.c.l.b16 %v205
    %v773 = vunpack.c.h.b16 %v205
    %v774 = vunpack.c.l.b16 %v206
    %v775 = vunpack.c.h.b16 %v206
    %v776 = vunpack.c.l.b16 %v207
    %v777 = vunpack.c.h.b16 %v207
    %v778 = vunpack.c.l.b16 %v208
    %v779 = vunpack.c.h.b16 %v208
    %v780 = vunpack.c.l.b16 %v209
    %v781 = vunpack.c.h.b16 %v209
    %v782 = vunpack.c.l.b16 %v210
    %v783 = vunpack.c.h.b16 %v210
    %v784 = vunpack.c.l.b16 %v211
    %v785 = vunpack.c.h.b16 %v211
    %v786 = vunpack.c.l.b16 %v212
    %v787 = vunpack.c.h.b16 %v212
    %v788 = vunpack.c.l.b16 %v213
    %v789 = vunpack.c.h.b16 %v213
    %v790 = vunpack.c.l.b16 %v214
    %v791 = vunpack.c.h.b16 %v214
    %v792 = vunpack.c.l.b16 %v215
    %v793 = vunpack.c.h.b16 %v215
    %v794 = vunpack.c.l.b16 %v216
    %v795 = vunpack.c.h.b16 %v216
    %v796 = vunpack.c.l.b16 %v217
    %v797 = vunpack.c.h.b16 %v217
    %v798 = vunpack.c.l.b16 %v218
    %v799 = vunpack.c.h.b16 %v218
    %v800 = vunpack.c.l.b16 %v219
    %v801 = vunpack.c.h.b16 %v219
    %v802 = vunpack.c.l.b16 %v220
    %v803 = vunpack.c.h.b16 %v220
    %v804 = vunpack.c.l.b16 %v221
    %v805 = vunpack.c.h.b16 %v221
    %v806 = vunpack.c.l.b16 %v222
    %v807 = vunpack.c.h.b16 %v222
    %v808 = vunpack.c.l.b16 %v223
    %v809 = vunpack.c.h.b16 %v223
    %v810 = vunpack.c.l.b16 %v224
    %v811 = vunpack.c.h.b16 %v224
    %v812 = vunpack.c.l.b16 %v225
    %v813 = vunpack.c.h.b16 %v225
    %v814 = vunpack.c.l.b16 %v226
    %v815 = vunpack.c.h.b16 %v226
    %v816 = vunpack.c.l.b16 %v227
    %v817 = vunpack.c.h.b16 %v227
    %v818 = vunpack.c.l.b16 %v228
    %v819 = vunpack.c.h.b16 %v228
    %v820 = vunpack.c.l.b16 %v229
    %v821 = vunpack.c.h.b16 %v229
    %v822 = vunpack.c.l.b16 %v230
    %v823 = vunpack.c.h.b16 %v230
    %v824 = vunpack.c.l.b16 %v231
    %v825 = vunpack.c.h.b16 %v231
    %v826 = vunpack.c.l.b16 %v232
    %v827 = vunpack.c.h.b16 %v232
    %v828 = vunpack.c.l.b16 %v233
    %v829 = vunpack.c.h.b16 %v233
    %v830 = vunpack.c.l.b16 %v234
    %v831 = vunpack.c.h.b16 %v234
    %v832 = vunpack.c.l.b16 %v235
    %v833 = vunpack.c.h.b16 %v235
    %v834 = vunpack.c.l.b16 %v236
    %v835 = vunpack.c.h.b16 %v236
    %v836 = vunpack.c.l.b16 %v237
    %v837 = vunpack.c.h.b16 %v237
    %v838 = vunpack.c.l.b16 %v238
    %v839 = vunpack.c.h.b16 %v238
    %v840 = vunpack.c.l.b16 %v239
    %v841 = vunpack.c.h.b16 %v239
    %v842 = vunpack.c.l.b16 %v240
    %v843 = vunpack.c.h.b16 %v240
    %v844 = vunpack.c.l.b16 %v241
    %v845 = vunpack.c.h.b16 %v241
    %v846 = vunpack.c.l.b16 %v242
    %v847 = vunpack.c.h.b16 %v242
    %v848 = vunpack.c.l.b16 %v243
    %v849 = vunpack.c.h.b16 %v243
    %v850 = vunpack.c.l.b16 %v244
    %v851 = vunpack.c.h.b16 %v244
    %v852 = vunpack.c.l.b16 %v245
    %v853 = vunpack.c.h.b16 %v245
    %v854 = vunpack.c.l.b16 %v246
    %v855 = vunpack.c.h.b16 %v246
    %v856 = vunpack.c.l.b16 %v247
    %v857 = vunpack.c.h.b16 %v247
    %v858 = vunpack.c.l.b16 %v248
    %v859 = vunpack.c.h.b16 %v248
    %v860 = vunpack.c.l.b16 %v249
    %v861 = vunpack.c.h.b16 %v249
    %v862 = vunpack.c.l.b16 %v250
    %v863 = vunpack.c.h.b16 %v250
    %v864 = vunpack.c.l.b16 %v251
    %v865 = vunpack.c.h.b16 %v251
    %v866 = vunpack.c.l.b16 %v252
    %v867 = vunpack.c.h.b16 %v252
    %v868 = vunpack.c.l.b16 %v253
    %v869 = vunpack.c.h.b16 %v253
    %v870 = vunpack.c.l.b16 %v254
    %v871 = vunpack.c.h.b16 %v254
    %v872 = vunpack.c.l.b16 %v255
    %v873 = vunpack.c.h.b16 %v255
    %v874 = vunpack.c.l.b16 %v256
    %v875 = vunpack.c.h.b16 %v256
    %v876 = vunpack.c.l.b16 %v257
    %v877 = vunpack.c.h.b16 %v257
    %v878 = vunpack.c.l.b16 %v258
    %v879 = vunpack.c.h.b16 %v258
    %v880 = vunpack.c.l.b16 %v259
    %v881 = vunpack.c.h.b16 %v259
    %v882 = vunpack.c.l.b16 %v260
    %v883 = vunpack.c.h.b16 %v260
    %v884 = vunpack.c.l.b16 %v261
    %v885 = vunpack.c.h.b16 %v261
    %v886 = vunpack.c.l.b16 %v262
    %v887 = vunpack.c.h.b16 %v262
    %v888 = vunpack.c.l.b16 %v263
    %v889 = vunpack.c.h.b16 %v263
    %v890 = vunpack.c.l.b16 %v264
    %v891 = vunpack.c.h.b16 %v264
    %v892 = vunpack.c.l.b16 %v265
    %v893 = vunpack.c.h.b16 %v265
    %v894 = vunpack.c.l.b16 %v266
    %v895 = vunpack.c.h.b16 %v266
    %v896 = vunpack.c.l.b16 %v267
    %v897 = vunpack.c.h.b16 %v267
    %v898 = vunpack.c.l.b16 %v268
    %v899 = vunpack.c.h.b16 %v268
    %v900 = vunpack.c.l.b16 %v269
    %v901 = vunpack.c.h.b16 %v269
    %v902 = vunpack.c.l.b16 %v270
    %v903 = vunpack.c.h.b16 %v270
    %v904 = vunpack.c.l.b16 %v271
    %v905 = vunpack.c.h.b16 %v271
    %v906 = vunpack.c.l.b16 %v272
    %v907 = vunpack.c.h.b16 %v272
    %v908 = vunpack.c.l.b16 %v273
    %v909 = vunpack.c.h.b16 %v273
    %v910 = vunpack.c.l.b16 %v274
    %v911 = vunpack.c.h.b16 %v274
    %v912 = vunpack.c.l.b16 %v275
    %v913 = vunpack.c.h.b16 %v275
    %v914 = vunpack.c.l.b16 %v276
    %v915 = vunpack.c.h.b16 %v276
    %v916 = vunpack.c.l.b16 %v277
    %v917 = vunpack.c.h.b16 %v277
    %v918 = vunpack.c.l.b16 %v278
    %v919 = vunpack.c.h.b16 %v278
    %v920 = vunpack.c.l.b16 %v279
    %v921 = vunpack.c.h.b16 %v279
    %v922 = vunpack.c.l.b16 %v280
    %v923 = vunpack.c.h.b16 %v280
    %v924 = vunpack.c.l.b16 %v281
    %v925 = vunpack.c.h.b16 %v281
    %v926 = vunpack.c.l.b16 %v282
    %v927 = vunpack.c.h.b16 %v282
    %v928 = vpack.c.b16 %v538, %v536
    %v929 = vpack.c.b16 %v539, %v537
    %v930 = vpack.c.b16 %v542, %v540
    %v931 = vpack.c.b16 %v543, %v541
    %v932 = vpack.c.b16 %v546, %v544
    %v933 = vpack.c.b16 %v547, %v545
    %v934 = vpack.c.b16 %v550, %v548
    %v935 = vpack.c.b16 %v551, %v549
    %v936 = vpack.c.b16 %v554, %v552
    %v937 = vpack.c.b16 %v555, %v553
    %v938 = vpack.c.b16 %v558, %v556
    %v939 = vpack.c.b16 %v559, %v557
    %v940 = vpack.c.b16 %v562, %v560
    %v941 = vpack.c.b16 %v563, %v561
    %v942 = vpack.c.b16 %v566, %v564
    %v943 = vpack.c.b16 %v567, %v565
    %v944 = vpack.c.b16 %v570, %v568
    %v945 = vpack.c.b16 %v571, %v569
    %v946 = vpack.c.b16 %v574, %v572
    %v947 = vpack.c.b16 %v575, %v573
    %v948 = vpack.c.b16 %v578, %v576
    %v949 = vpack.c.b16 %v579, %v577
    %v950 = vpack.c.b16 %v582, %v580
    %v951 = vpack.c.b16 %v583, %v581
    %v952 = vpack.c.b16 %v586, %v584
    %v953 = vpack.c.b16 %v587, %v585
    %v954 = vpack.c.b16 %v590, %v588
    %v955 = vpack.c.b16 %v591, %v589
    %v956 = vpack.c.b16 %v594, %v592
    %v957 = vpack.c.b16 %v595, %v593
    %v958 = vpack.c.b16 %v598, %v596
    %v959 = vpack.c.b16 %v599, %v597
    %v960 = vpack.c.b16 %v602, %v600
    %v961 = vpack.c.b16 %v603, %v601
    %v962 = vpack.c.b16 %v606, %v604
    %v963 = vpack.c.b16 %v607, %v605
    %v964 = vpack.c.b16 %v610, %v608
    %v965 = vpack.c.b16 %v611, %v609
    %v966 = vpack.c.b16 %v614, %v612
    %v967 = vpack.c.b16 %v615, %v613
    %v968 = vpack.c.b16 %v618, %v616
    %v969 = vpack.c.b16 %v619, %v617
    %v970 = vpack.c.b16 %v622, %v620
    %v971 = vpack.c.b16 %v623, %v621
    %v972 = vpack.c.b16 %v626, %v624
    %v973 = vpack.c.b16 %v627, %v625
    %v974 = vpack.c.b16 %v630, %v628
    %v975 = vpack.c.b16 %v631, %v629
    %v976 = vpack.c.b16 %v634, %v632
    %v977 = vpack.c.b16 %v635, %v633
    %v978 = vpack.c.b16 %v638, %v636
    %v979 = vpack.c.b16 %v639, %v637
    %v980 = vpack.c.b16 %v642, %v640
    %v981 = vpack.c.b16 %v643, %v641
    %v982 = vpack.c.b16 %v646, %v644
    %v983 = vpack.c.b16 %v647, %v645
    %v984 = vpack.c.b16 %v650, %v648
    %v985 = vpack.c.b16 %v651, %v649
    %v986 = vpack.c.b16 %v654, %v652
    %v987 = vpack.c.b16 %v655, %v653
    %v988 = vpack.c.b16 %v658, %v656
    %v989 = vpack.c.b16 %v659, %v657
    %v990 = vpack.c.b16 %v662, %v660
    %v991 = vpack.c.b16 %v663, %v661
    %v992 = vpack.c.b16 %v666, %v664
    %v993 = vpack.c.b16 %v667, %v665
    %v994 = vpack.c.b16 %v670, %v668
    %v995 = vpack.c.b16 %v671, %v669
    %v996 = vpack.c.b16 %v674, %v672
    %v997 = vpack.c.b16 %v675, %v673
    %v998 = vpack.c.b16 %v678, %v676
    %v999 = vpack.c.b16 %v679, %v677
    %v1000 = vpack.c.b16 %v682, %v680
    %v1001 = vpack.c.b16 %v683, %v681
    %v1002 = vpack.c.b16 %v686, %v684
    %v1003 = vpack.c.b16 %v687, %v685
    %v1004 = vpack.c.b16 %v690, %v688
    %v1005 = vpack.c.b16 %v691, %v689
    %v1006 = vpack.c.b16 %v694, %v692
    %v1007 = vpack.c.b16 %v695, %v693
    %v1008 = vpack.c.b16 %v698, %v696
    %v1009 = vpack.c.b16 %v699, %v697
    %v1010 = vpack.c.b16 %v702, %v700
    %v1011 = vpack.c.b16 %v703, %v701
    %v1012 = vpack.c.b16 %v706, %v704
    %v1013 = vpack.c.b16 %v707, %v705
    %v1014 = vpack.c.b16 %v710, %v708
    %v1015 = vpack.c.b16 %v711, %v709
    %v1016 = vpack.c.b16 %v714, %v712
    %v1017 = vpack.c.b16 %v715, %v713
    %v1018 = vpack.c.b16 %v718, %v716
    %v1019 = vpack.c.b16 %v719, %v717
    %v1020 = vpack.c.b16 %v722, %v720
    %v1021 = vpack.c.b16 %v723, %v721
    %v1022 = vpack.c.b16 %v726, %v724
    %v1023 = vpack.c.b16 %v727, %v725
    %v1024 = vpack.c.b16 %v730, %v728
    %v1025 = vpack.c.b16 %v731, %v729
    %v1026 = vpack.c.b16 %v734, %v732
    %v1027 = vpack.c.b16 %v735, %v733
    %v1028 = vpack.c.b16 %v738, %v736
    %v1029 = vpack.c.b16 %v739, %v737
    %v1030 = vpack.c.b16 %v742, %v740
    %v1031 = vpack.c.b16 %v743, %v741
    %v1032 = vpack.c.b16 %v746, %v744
    %v1033 = vpack.c.b16 %v747, %v745
    %v1034 = vpack.c.b16 %v750, %v748
    %v1035 = vpack.c.b16 %v751, %v749
    %v1036 = vpack.c.b16 %v754, %v752
    %v1037 = vpack.c.b16 %v755, %v753
    %v1038 = vpack.c.b16 %v758, %v756
    %v1039 = vpack.c.b16 %v759, %v757
    %v1040 = vpack.c.b16 %v762, %v760
    %v1041 = vpack.c.b16 %v763, %v761
    %v1042 = vpack.c.b16 %v766, %v764
    %v1043 = vpack.c.b16 %v767, %v765
    %v1044 = vpack.c.b16 %v770, %v768
    %v1045 = vpack.c.b16 %v771, %v769
    %v1046 = vpack.c.b16 %v774, %v772
    %v1047 = vpack.c.b16 %v775, %v773
    %v1048 = vpack.c.b16 %v778, %v776
    %v1049 = vpack.c.b16 %v779, %v777
    %v1050 = vpack.c.b16 %v782, %v780
    %v1051 = vpack.c.b16 %v783, %v781
    %v1052 = vpack.c.b16 %v786, %v784
    %v1053 = vpack.c.b16 %v787, %v785
    %v1054 = vpack.c.b16 %v790, %v788
    %v1055 = vpack.c.b16 %v791, %v789
    %v1056 = vpack.c.b16 %v794, %v792
    %v1057 = vpack.c.b16 %v795, %v793
    %v1058 = vpack.c.b16 %v798, %v796
    %v1059 = vpack.c.b16 %v799, %v797
    %v1060 = vpack.c.b16 %v802, %v800
    %v1061 = vpack.c.b16 %v803, %v801
    %v1062 = vpack.c.b16 %v806, %v804
    %v1063 = vpack.c.b16 %v807, %v805
    %v1064 = vpack.c.b16 %v810, %v808
    %v1065 = vpack.c.b16 %v811, %v809
    %v1066 = vpack.c.b16 %v814, %v812
    %v1067 = vpack.c.b16 %v815, %v813
    %v1068 = vpack.c.b16 %v818, %v816
    %v1069 = vpack.c.b16 %v819, %v817
    %v1070 = vpack.c.b16 %v822, %v820
    %v1071 = vpack.c.b16 %v823, %v821
    %v1072 = vpack.c.b16 %v826, %v824
    %v1073 = vpack.c.b16 %v827, %v825
    %v1074 = vpack.c.b16 %v830, %v828
    %v1075 = vpack.c.b16 %v831, %v829
    %v1076 = vpack.c.b16 %v834, %v832
    %v1077 = vpack.c.b16 %v835, %v833
    %v1078 = vpack.c.b16 %v838, %v836
    %v1079 = vpack.c.b16 %v839, %v837
    %v1080 = vpack.c.b16 %v842, %v840
    %v1081 = vpack.c.b16 %v843, %v841
    %v1082 = vpack.c.b16 %v846, %v844
    %v1083 = vpack.c.b16 %v847, %v845
    %v1084 = vpack.c.b16 %v850, %v848
    %v1085 = vpack.c.b16 %v851, %v849
    %v1086 = vpack.c.b16 %v854, %v852
    %v1087 = vpack.c.b16 %v855, %v853
    %v1088 = vpack.c.b16 %v858, %v856
    %v1089 = vpack.c.b16 %v859, %v857
    %v1090 = vpack.c.b16 %v862, %v860
    %v1091 = vpack.c.b16 %v863, %v861
    %v1092 = vpack.c.b16 %v866, %v864
    %v1093 = vpack.c.b16 %v867, %v865
    %v1094 = vpack.c.b16 %v870, %v868
    %v1095 = vpack.c.b16 %v871, %v869
    %v1096 = vpack.c.b16 %v874, %v872
    %v1097 = vpack.c.b16 %v875, %v873
    %v1098 = vpack.c.b16 %v878, %v876
    %v1099 = vpack.c.b16 %v879, %v877
    %v1100 = vpack.c.b16 %v882, %v880
    %v1101 = vpack.c.b16 %v883, %v881
    %v1102 = vpack.c.b16 %v886, %v884
    %v1103 = vpack.c.b16 %v887, %v885
    %v1104 = vpack.c.b16 %v890, %v888
    %v1105 = vpack.c.b16 %v891, %v889
    %v1106 = vpack.c.b16 %v894, %v892
    %v1107 = vpack.c.b16 %v895, %v893
    %v1108 = vpack.c.b16 %v898, %v896
    %v1109 = vpack.c.b16 %v899, %v897
    %v1110 = vpack.c.b16 %v902, %v900
    %v1111 = vpack.c.b16 %v903, %v901
    %v1112 = vpack.c.b16 %v906, %v904
    %v1113 = vpack.c.b16 %v907, %v905
    %v1114 = vpack.c.b16 %v910, %v908
    %v1115 = vpack.c.b16 %v911, %v909
    %v1116 = vpack.c.b16 %v914, %v912
    %v1117 = vpack.c.b16 %v915, %v913
    %v1118 = vpack.c.b16 %v918, %v916
    %v1119 = vpack.c.b16 %v919, %v917
    %v1120 = vpack.c.b16 %v922, %v920
    %v1121 = vpack.c.b16 %v923, %v921
    %v1122 = vpack.c.b16 %v926, %v924
    %v1123 = vpack.c.b16 %v927, %v925
    %vm1320 = vcmask 261120
    %v1322 = vsel %vm1320, %v327, 0
    %1324 = vmatprep.subr.bf16.mxu0 %v929
    %1325 = vmatpush1.bf16.msra.mxu0 %v928
    %1326 = vmatprep.subr.bf16.mxu0 %v931
    %1327 = vmatpush1.bf16.msra.mxu0 %v930
    %1328 = vmatprep.subr.bf16.mxu0 %v933
    %1329 = vmatpush1.bf16.msra.mxu0 %v932
    %1330 = vmatprep.subr.bf16.mxu0 %v935
    %1331 = vmatpush1.bf16.msra.mxu0 %v934
    %1332 = vmatprep.subr.bf16.mxu0 %v937
    %1333 = vmatpush1.bf16.msra.mxu0 %v936
    %1334 = vmatprep.subr.bf16.mxu0 %v939
    %1335 = vmatpush1.bf16.msra.mxu0 %v938
    %1336 = vmatprep.subr.bf16.mxu0 %v941
    %1337 = vmatpush1.bf16.msra.mxu0 %v940
    %1338 = vmatprep.subr.bf16.mxu0 %v943
    %1339 = vmatpush1.bf16.msra.mxu0 %v942
    %1340 = vmatprep.subr.bf16.mxu0 %v945
    %1341 = vmatpush1.bf16.msra.mxu0 %v944
    %1342 = vmatprep.subr.bf16.mxu0 %v947
    %1343 = vmatpush1.bf16.msra.mxu0 %v946
    %1344 = vmatprep.subr.bf16.mxu0 %v949
    %1345 = vmatpush1.bf16.msra.mxu0 %v948
    %1346 = vmatprep.subr.bf16.mxu0 %v951
    %1347 = vmatpush1.bf16.msra.mxu0 %v950
    %1348 = vmatprep.subr.bf16.mxu0 %v953
    %1349 = vmatpush1.bf16.msra.mxu0 %v952
    %1350 = vmatprep.subr.bf16.mxu0 %v955
    %1351 = vmatpush1.bf16.msra.mxu0 %v954
    %1352 = vmatprep.subr.bf16.mxu0 %v957
    %1353 = vmatpush1.bf16.msra.mxu0 %v956
    %1354 = vmatprep.subr.bf16.mxu0 %v959
    %1355 = vmatpush1.bf16.msra.mxu0 %v958
    %1356 = vmatprep.mubr.bf16.mxu0 %v316
    %1357 = vmatmul.mubr.bf16.gmra.mrb[0].mxu0 %v315
    %v1358 = vpop.f32.mrb[0].mxu0
    %v1359 = vadd.f32 %v288, %v1358
    %v1360 = vpop.f32.mrb[0].mxu0
    %v1361 = vadd.f32 %v292, %v1360
    %v1362 = vpop.f32.mrb[0].mxu0
    %v1363 = vpop.f32.mrb[0].mxu0
    %1364 = vdwg.mxu0
    %1365 = vmatprep.subr.bf16.mxu0 %v961
    %1366 = vmatpush1.bf16.msra.mxu0 %v960
    %1367 = vmatprep.subr.bf16.mxu0 %v963
    %1368 = vmatpush1.bf16.msra.mxu0 %v962
    %1369 = vmatprep.subr.bf16.mxu0 %v965
    %1370 = vmatpush1.bf16.msra.mxu0 %v964
    %1371 = vmatprep.subr.bf16.mxu0 %v967
    %1372 = vmatpush1.bf16.msra.mxu0 %v966
    %1373 = vmatprep.subr.bf16.mxu0 %v969
    %1374 = vmatpush1.bf16.msra.mxu0 %v968
    %1375 = vmatprep.subr.bf16.mxu0 %v971
    %1376 = vmatpush1.bf16.msra.mxu0 %v970
    %1377 = vmatprep.subr.bf16.mxu0 %v973
    %1378 = vmatpush1.bf16.msra.mxu0 %v972
    %1379 = vmatprep.subr.bf16.mxu0 %v975
    %1380 = vmatpush1.bf16.msra.mxu0 %v974
    %1381 = vmatprep.subr.bf16.mxu0 %v977
    %1382 = vmatpush1.bf16.msra.mxu0 %v976
    %1383 = vmatprep.subr.bf16.mxu0 %v979
    %1384 = vmatpush1.bf16.msra.mxu0 %v978
    %1385 = vmatprep.subr.bf16.mxu0 %v981
    %1386 = vmatpush1.bf16.msra.mxu0 %v980
    %1387 = vmatprep.subr.bf16.mxu0 %v983
    %1388 = vmatpush1.bf16.msra.mxu0 %v982
    %1389 = vmatprep.subr.bf16.mxu0 %v985
    %1390 = vmatpush1.bf16.msra.mxu0 %v984
    %1391 = vmatprep.subr.bf16.mxu0 %v987
    %1392 = vmatpush1.bf16.msra.mxu0 %v986
    %1393 = vmatprep.subr.bf16.mxu0 %v989
    %1394 = vmatpush1.bf16.msra.mxu0 %v988
    %1395 = vmatprep.subr.bf16.mxu0 %v991
    %1396 = vmatpush1.bf16.msra.mxu0 %v990
    %1397 = vmatprep.mubr.bf16.mxu0 %v318
    %1398 = vmatmul.mubr.bf16.gmra.mrb[0].mxu0 %v317
    %v1399 = vpop.f32.mrb[0].mxu0
    %v1400 = vadd.f32 %v1359, %v1399
    %v1401 = vpop.f32.mrb[0].mxu0
    %v1402 = vadd.f32 %v1361, %v1401
    %v1403 = vpop.f32.mrb[0].mxu0
    %v1404 = vpop.f32.mrb[0].mxu0
    %1405 = vdwg.mxu0
    %1406 = vmatprep.subr.bf16.mxu0 %v993
    %1407 = vmatpush1.bf16.msra.mxu0 %v992
    %1408 = vmatprep.subr.bf16.mxu0 %v995
    %1409 = vmatpush1.bf16.msra.mxu0 %v994
    %1410 = vmatprep.subr.bf16.mxu0 %v997
    %1411 = vmatpush1.bf16.msra.mxu0 %v996
    %1412 = vmatprep.subr.bf16.mxu0 %v999
    %1413 = vmatpush1.bf16.msra.mxu0 %v998
    %1414 = vmatprep.subr.bf16.mxu0 %v1001
    %1415 = vmatpush1.bf16.msra.mxu0 %v1000
    %1416 = vmatprep.subr.bf16.mxu0 %v1003
    %1417 = vmatpush1.bf16.msra.mxu0 %v1002
    %1418 = vmatprep.subr.bf16.mxu0 %v1005
    %1419 = vmatpush1.bf16.msra.mxu0 %v1004
    %1420 = vmatprep.subr.bf16.mxu0 %v1007
    %1421 = vmatpush1.bf16.msra.mxu0 %v1006
    %1422 = vmatprep.subr.bf16.mxu0 %v1009
    %1423 = vmatpush1.bf16.msra.mxu0 %v1008
    %1424 = vmatprep.subr.bf16.mxu0 %v1011
    %1425 = vmatpush1.bf16.msra.mxu0 %v1010
    %1426 = vmatprep.subr.bf16.mxu0 %v1013
    %1427 = vmatpush1.bf16.msra.mxu0 %v1012
    %1428 = vmatprep.subr.bf16.mxu0 %v1015
    %1429 = vmatpush1.bf16.msra.mxu0 %v1014
    %1430 = vmatprep.subr.bf16.mxu0 %v1017
    %1431 = vmatpush1.bf16.msra.mxu0 %v1016
    %1432 = vmatprep.subr.bf16.mxu0 %v1019
    %1433 = vmatpush1.bf16.msra.mxu0 %v1018
    %1434 = vmatprep.subr.bf16.mxu0 %v1021
    %1435 = vmatpush1.bf16.msra.mxu0 %v1020
    %1436 = vmatprep.subr.bf16.mxu0 %v1023
    %1437 = vmatpush1.bf16.msra.mxu0 %v1022
    %1438 = vmatprep.mubr.bf16.mxu0 %v320
    %1439 = vmatmul.mubr.bf16.gmra.mrb[0].mxu0 %v319
    %v1440 = vpop.f32.mrb[0].mxu0
    %v1441 = vadd.f32 %v1400, %v1440
    %v1442 = vpop.f32.mrb[0].mxu0
    %v1443 = vadd.f32 %v1402, %v1442
    %v1444 = vpop.f32.mrb[0].mxu0
    %v1445 = vpop.f32.mrb[0].mxu0
    %1446 = vdwg.mxu0
    %1447 = vmatprep.subr.bf16.mxu0 %v1025
    %1448 = vmatpush1.bf16.msra.mxu0 %v1024
    %1449 = vmatprep.subr.bf16.mxu0 %v1027
    %1450 = vmatpush1.bf16.msra.mxu0 %v1026
    %1451 = vmatprep.subr.bf16.mxu0 %v1029
    %1452 = vmatpush1.bf16.msra.mxu0 %v1028
    %1453 = vmatprep.subr.bf16.mxu0 %v1031
    %1454 = vmatpush1.bf16.msra.mxu0 %v1030
    %1455 = vmatprep.subr.bf16.mxu0 %v1033
    %1456 = vmatpush1.bf16.msra.mxu0 %v1032
    %1457 = vmatprep.subr.bf16.mxu0 %v1035
    %1458 = vmatpush1.bf16.msra.mxu0 %v1034
    %1459 = vmatprep.subr.bf16.mxu0 %v1037
    %1460 = vmatpush1.bf16.msra.mxu0 %v1036
    %1461 = vmatprep.subr.bf16.mxu0 %v1039
    %1462 = vmatpush1.bf16.msra.mxu0 %v1038
    %1463 = vmatprep.subr.bf16.mxu0 %v1041
    %1464 = vmatpush1.bf16.msra.mxu0 %v1040
    %1465 = vmatprep.subr.bf16.mxu0 %v1043
    %1466 = vmatpush1.bf16.msra.mxu0 %v1042
    %1467 = vmatprep.subr.bf16.mxu0 %v1045
    %1468 = vmatpush1.bf16.msra.mxu0 %v1044
    %1469 = vmatprep.subr.bf16.mxu0 %v1047
    %1470 = vmatpush1.bf16.msra.mxu0 %v1046
    %1471 = vmatprep.subr.bf16.mxu0 %v1049
    %1472 = vmatpush1.bf16.msra.mxu0 %v1048
    %1473 = vmatprep.subr.bf16.mxu0 %v1051
    %1474 = vmatpush1.bf16.msra.mxu0 %v1050
    %1475 = vmatprep.subr.bf16.mxu0 %v1053
    %1476 = vmatpush1.bf16.msra.mxu0 %v1052
    %1477 = vmatprep.subr.bf16.mxu0 %v1055
    %1478 = vmatpush1.bf16.msra.mxu0 %v1054
    %1479 = vmatprep.mubr.bf16.mxu0 %v322
    %1480 = vmatmul.mubr.bf16.gmra.mrb[0].mxu0 %v321
    %v1481 = vpop.f32.mrb[0].mxu0
    %v1482 = vadd.f32 %v1441, %v1481
    %v1483 = vpop.f32.mrb[0].mxu0
    %v1484 = vadd.f32 %v1443, %v1483
    %v1485 = vpop.f32.mrb[0].mxu0
    %v1486 = vpop.f32.mrb[0].mxu0
    %1487 = vdwg.mxu0
    %1488 = vmatprep.subr.bf16.mxu0 %v1057
    %1489 = vmatpush1.bf16.msra.mxu0 %v1056
    %1490 = vmatprep.subr.bf16.mxu0 %v1059
    %1491 = vmatpush1.bf16.msra.mxu0 %v1058
    %1492 = vmatprep.subr.bf16.mxu0 %v1061
    %1493 = vmatpush1.bf16.msra.mxu0 %v1060
    %1494 = vmatprep.subr.bf16.mxu0 %v1063
    %1495 = vmatpush1.bf16.msra.mxu0 %v1062
    %1496 = vmatprep.subr.bf16.mxu0 %v1065
    %1497 = vmatpush1.bf16.msra.mxu0 %v1064
    %1498 = vmatprep.subr.bf16.mxu0 %v1067
    %1499 = vmatpush1.bf16.msra.mxu0 %v1066
    %1500 = vmatprep.subr.bf16.mxu0 %v1069
    %1501 = vmatpush1.bf16.msra.mxu0 %v1068
    %1502 = vmatprep.subr.bf16.mxu0 %v1071
    %1503 = vmatpush1.bf16.msra.mxu0 %v1070
    %1504 = vmatprep.subr.bf16.mxu0 %v1073
    %1505 = vmatpush1.bf16.msra.mxu0 %v1072
    %1506 = vmatprep.subr.bf16.mxu0 %v1075
    %1507 = vmatpush1.bf16.msra.mxu0 %v1074
    %1508 = vmatprep.subr.bf16.mxu0 %v1077
    %1509 = vmatpush1.bf16.msra.mxu0 %v1076
    %1510 = vmatprep.subr.bf16.mxu0 %v1079
    %1511 = vmatpush1.bf16.msra.mxu0 %v1078
    %1512 = vmatprep.subr.bf16.mxu0 %v1081
    %1513 = vmatpush1.bf16.msra.mxu0 %v1080
    %1514 = vmatprep.subr.bf16.mxu0 %v1083
    %1515 = vmatpush1.bf16.msra.mxu0 %v1082
    %1516 = vmatprep.subr.bf16.mxu0 %v1085
    %1517 = vmatpush1.bf16.msra.mxu0 %v1084
    %1518 = vmatprep.subr.bf16.mxu0 %v1087
    %1519 = vmatpush1.bf16.msra.mxu0 %v1086
    %1520 = vmatprep.mubr.bf16.mxu0 %v324
    %1521 = vmatmul.mubr.bf16.gmra.mrb[0].mxu0 %v323
    %v1522 = vpop.f32.mrb[0].mxu0
    %v1523 = vadd.f32 %v1482, %v1522
    %v1524 = vpop.f32.mrb[0].mxu0
    %v1525 = vadd.f32 %v1484, %v1524
    %v1526 = vpop.f32.mrb[0].mxu0
    %v1527 = vpop.f32.mrb[0].mxu0
    %1528 = vdwg.mxu0
    %1529 = vmatprep.subr.bf16.mxu0 %v1089
    %1530 = vmatpush1.bf16.msra.mxu0 %v1088
    %1531 = vmatprep.subr.bf16.mxu0 %v1091
    %1532 = vmatpush1.bf16.msra.mxu0 %v1090
    %1533 = vmatprep.subr.bf16.mxu0 %v1093
    %1534 = vmatpush1.bf16.msra.mxu0 %v1092
    %1535 = vmatprep.subr.bf16.mxu0 %v1095
    %1536 = vmatpush1.bf16.msra.mxu0 %v1094
    %1537 = vmatprep.subr.bf16.mxu0 %v1097
    %1538 = vmatpush1.bf16.msra.mxu0 %v1096
    %1539 = vmatprep.subr.bf16.mxu0 %v1099
    %1540 = vmatpush1.bf16.msra.mxu0 %v1098
    %1541 = vmatprep.subr.bf16.mxu0 %v1101
    %1542 = vmatpush1.bf16.msra.mxu0 %v1100
    %1543 = vmatprep.subr.bf16.mxu0 %v1103
    %1544 = vmatpush1.bf16.msra.mxu0 %v1102
    %1545 = vmatprep.subr.bf16.mxu0 %v1105
    %1546 = vmatpush1.bf16.msra.mxu0 %v1104
    %1547 = vmatprep.subr.bf16.mxu0 %v1107
    %1548 = vmatpush1.bf16.msra.mxu0 %v1106
    %1549 = vmatprep.subr.bf16.mxu0 %v1109
    %1550 = vmatpush1.bf16.msra.mxu0 %v1108
    %1551 = vmatprep.subr.bf16.mxu0 %v1111
    %1552 = vmatpush1.bf16.msra.mxu0 %v1110
    %1553 = vmatprep.subr.bf16.mxu0 %v1113
    %1554 = vmatpush1.bf16.msra.mxu0 %v1112
    %1555 = vmatprep.subr.bf16.mxu0 %v1115
    %1556 = vmatpush1.bf16.msra.mxu0 %v1114
    %1557 = vmatprep.subr.bf16.mxu0 %v1117
    %1558 = vmatpush1.bf16.msra.mxu0 %v1116
    %1559 = vmatprep.subr.bf16.mxu0 %v1119
    %1560 = vmatpush1.bf16.msra.mxu0 %v1118
    %1561 = vmatprep.mubr.bf16.mxu0 %v326
    %1562 = vmatmul.mubr.bf16.gmra.mrb[0].mxu0 %v325
    %v1563 = vpop.f32.mrb[0].mxu0
    %v1564 = vadd.f32 %v1523, %v1563
    %v1565 = vpop.f32.mrb[0].mxu0
    %v1566 = vadd.f32 %v1525, %v1565
    %v1567 = vpop.f32.mrb[0].mxu0
    %v1568 = vpop.f32.mrb[0].mxu0
    %1569 = vdwg.mxu0
    %1570 = vmatprep.subr.bf16.mxu0 %v1121
    %1571 = vmatpush1.bf16.msra.mxu0 %v1120
    %1572 = vmatprep.subr.bf16.mxu0 %v1123
    %1573 = vmatpush1.bf16.msra.mxu0 %v1122
    %1574 = vmatprep.subr.bf16.mxu0 0
    %1575 = vmatpush1.bf16.msra.mxu0 0
    %1576 = vmatprep.subr.bf16.mxu0 0
    %1577 = vmatpush1.bf16.msra.mxu0 0
    %1578 = vmatprep.subr.bf16.mxu0 0
    %1579 = vmatpush1.bf16.msra.mxu0 0
    %1580 = vmatprep.subr.bf16.mxu0 0
    %1581 = vmatpush1.bf16.msra.mxu0 0
    %1582 = vmatprep.subr.bf16.mxu0 0
    %1583 = vmatpush1.bf16.msra.mxu0 0
    %1584 = vmatprep.subr.bf16.mxu0 0
    %1585 = vmatpush1.bf16.msra.mxu0 0
    %1586 = vmatprep.subr.bf16.mxu0 0
    %1587 = vmatpush1.bf16.msra.mxu0 0
    %1588 = vmatprep.subr.bf16.mxu0 0
    %1589 = vmatpush1.bf16.msra.mxu0 0
    %1590 = vmatprep.subr.bf16.mxu0 0
    %1591 = vmatpush1.bf16.msra.mxu0 0
    %1592 = vmatprep.subr.bf16.mxu0 0
    %1593 = vmatpush1.bf16.msra.mxu0 0
    %1594 = vmatprep.subr.bf16.mxu0 0
    %1595 = vmatpush1.bf16.msra.mxu0 0
    %1596 = vmatprep.subr.bf16.mxu0 0
    %1597 = vmatpush1.bf16.msra.mxu0 0
    %1598 = vmatprep.subr.bf16.mxu0 0
    %1599 = vmatpush1.bf16.msra.mxu0 0
    %1600 = vmatprep.subr.bf16.mxu0 0
    %1601 = vmatpush1.bf16.msra.mxu0 0
    %1602 = vmatprep.mubr.bf16.mxu0 0
    %1603 = vmatmul.mubr.bf16.gmra.mrb[0].mxu0 %v1322
    %v1604 = vpop.f32.mrb[0].mxu0
    %v1605 = vadd.f32 %v1564, %v1604
    %v1606 = vpop.f32.mrb[0].mxu0
    %v1607 = vadd.f32 %v1566, %v1606
    %v1608 = vpop.f32.mrb[0].mxu0
    %v1609 = vpop.f32.mrb[0].mxu0
    %1610 = vdwg.mxu0
    %v1611 = vmax.f32 %v1605, 0.0
    %v1612 = vmax.f32 %v1607, 0.0
    %v1613 = vpack.c.bf16 %v1611, %v1611
    %v1614 = vpack.c.bf16 %v1612, %v1612
    %v1615 = vld [vmem:[#allocation5] sm:$0xf]
    %v1616 = vld [vmem:[#allocation5 + $0x4] sm:$0xf]
    %v1617 = vld [vmem:[#allocation5 + $0x8] sm:$0xf]
    %v1618 = vld [vmem:[#allocation5 + $0xc] sm:$0xf]
    %v1619 = vld [vmem:[#allocation5 + $0x10] sm:$0xf]
    %v1620 = vld [vmem:[#allocation5 + $0x14] sm:$0xf]
    %v1621 = vld [vmem:[#allocation5 + $0x18] sm:$0xf]
    %v1622 = vld [vmem:[#allocation5 + $0x1c] sm:$0xf]
    %v1623 = vld [vmem:[#allocation5 + $0x20] sm:$0xf]
    %v1624 = vld [vmem:[#allocation5 + $0x24] sm:$0xf]
    %v1625 = vld [vmem:[#allocation5 + $0x28] sm:$0xf]
    %v1626 = vld [vmem:[#allocation5 + $0x2c] sm:$0xf]
    %v1627 = vld [vmem:[#allocation5 + $0x30] sm:$0xf]
    %v1628 = vld [vmem:[#allocation5 + $0x34] sm:$0xf]
    %v1629 = vld [vmem:[#allocation5 + $0x38] sm:$0xf]
    %v1630 = vld [vmem:[#allocation5 + $0x3c] sm:$0xf]
    %v1631 = vld [vmem:[#allocation5 + $0x40] sm:$0xf]
    %v1632 = vld [vmem:[#allocation5 + $0x44] sm:$0xf]
    %v1633 = vld [vmem:[#allocation5 + $0x48] sm:$0xf]
    %v1634 = vld [vmem:[#allocation5 + $0x4c] sm:$0xf]
    %v1635 = vld [vmem:[#allocation5 + $0x50] sm:$0xf]
    %v1636 = vld [vmem:[#allocation5 + $0x54] sm:$0xf]
    %v1637 = vld [vmem:[#allocation5 + $0x58] sm:$0xf]
    %v1638 = vld [vmem:[#allocation5 + $0x5c] sm:$0xf]
    %v1639 = vld [vmem:[#allocation5 + $0x60] sm:$0xf]
    %v1640 = vld [vmem:[#allocation5 + $0x64] sm:$0xf]
    %v1641 = vld [vmem:[#allocation5 + $0x68] sm:$0xf]
    %v1642 = vld [vmem:[#allocation5 + $0x6c] sm:$0xf]
    %v1643 = vld [vmem:[#allocation5 + $0x70] sm:$0xf]
    %v1644 = vld [vmem:[#allocation5 + $0x74] sm:$0xf]
    %v1645 = vld [vmem:[#allocation5 + $0x78] sm:$0xf]
    %v1646 = vld [vmem:[#allocation5 + $0x7c] sm:$0xf]
    %v1647 = vld [vmem:[#allocation7] sm:$0x1]
    %v1649 = vlaneseq
    %v1650 = vshrl.u32 %v1649, 7
    %v1651 = vsub.s32 0, %v1650
    %v1652 = vrot.slane %v1647, %v1651
    %v1686 = vunpack.c.l.b16 %v1615
    %v1687 = vunpack.c.l.b16 %v1616
    %v1688 = vunpack.c.l.b16 %v1617
    %v1689 = vunpack.c.l.b16 %v1618
    %v1690 = vunpack.c.l.b16 %v1619
    %v1691 = vunpack.c.l.b16 %v1620
    %v1692 = vunpack.c.l.b16 %v1621
    %v1693 = vunpack.c.l.b16 %v1622
    %v1694 = vunpack.c.l.b16 %v1623
    %v1695 = vunpack.c.l.b16 %v1624
    %v1696 = vunpack.c.l.b16 %v1625
    %v1697 = vunpack.c.l.b16 %v1626
    %v1698 = vunpack.c.l.b16 %v1627
    %v1699 = vunpack.c.l.b16 %v1628
    %v1700 = vunpack.c.l.b16 %v1629
    %v1701 = vunpack.c.l.b16 %v1630
    %v1702 = vunpack.c.l.b16 %v1631
    %v1703 = vunpack.c.l.b16 %v1632
    %v1704 = vunpack.c.l.b16 %v1633
    %v1705 = vunpack.c.l.b16 %v1634
    %v1706 = vunpack.c.l.b16 %v1635
    %v1707 = vunpack.c.l.b16 %v1636
    %v1708 = vunpack.c.l.b16 %v1637
    %v1709 = vunpack.c.l.b16 %v1638
    %v1710 = vunpack.c.l.b16 %v1639
    %v1711 = vunpack.c.l.b16 %v1640
    %v1712 = vunpack.c.l.b16 %v1641
    %v1713 = vunpack.c.l.b16 %v1642
    %v1714 = vunpack.c.l.b16 %v1643
    %v1715 = vunpack.c.l.b16 %v1644
    %v1716 = vunpack.c.l.b16 %v1645
    %v1717 = vunpack.c.l.b16 %v1646
    %v1718 = vpack.c.b16 %v1687, %v1686
    %v1719 = vpack.c.b16 %v1689, %v1688
    %v1720 = vpack.c.b16 %v1691, %v1690
    %v1721 = vpack.c.b16 %v1693, %v1692
    %v1722 = vpack.c.b16 %v1695, %v1694
    %v1723 = vpack.c.b16 %v1697, %v1696
    %v1724 = vpack.c.b16 %v1699, %v1698
    %v1725 = vpack.c.b16 %v1701, %v1700
    %v1726 = vpack.c.b16 %v1703, %v1702
    %v1727 = vpack.c.b16 %v1705, %v1704
    %v1728 = vpack.c.b16 %v1707, %v1706
    %v1729 = vpack.c.b16 %v1709, %v1708
    %v1730 = vpack.c.b16 %v1711, %v1710
    %v1731 = vpack.c.b16 %v1713, %v1712
    %v1732 = vpack.c.b16 %v1715, %v1714
    %v1733 = vpack.c.b16 %v1717, %v1716
    %1750 = vmatprep.subr.bf16.mxu0 0
    %1751 = vmatpush1.bf16.msra.mxu0 %v1718
    %1752 = vmatprep.subr.bf16.mxu0 0
    %1753 = vmatpush1.bf16.msra.mxu0 %v1719
    %1754 = vmatprep.subr.bf16.mxu0 0
    %1755 = vmatpush1.bf16.msra.mxu0 %v1720
    %1756 = vmatprep.subr.bf16.mxu0 0
    %1757 = vmatpush1.bf16.msra.mxu0 %v1721
    %1758 = vmatprep.subr.bf16.mxu0 0
    %1759 = vmatpush1.bf16.msra.mxu0 %v1722
    %1760 = vmatprep.subr.bf16.mxu0 0
    %1761 = vmatpush1.bf16.msra.mxu0 %v1723
    %1762 = vmatprep.subr.bf16.mxu0 0
    %1763 = vmatpush1.bf16.msra.mxu0 %v1724
    %1764 = vmatprep.subr.bf16.mxu0 0
    %1765 = vmatpush1.bf16.msra.mxu0 %v1725
    %1766 = vmatprep.subr.bf16.mxu0 0
    %1767 = vmatpush1.bf16.msra.mxu0 %v1726
    %1768 = vmatprep.subr.bf16.mxu0 0
    %1769 = vmatpush1.bf16.msra.mxu0 %v1727
    %1770 = vmatprep.subr.bf16.mxu0 0
    %1771 = vmatpush1.bf16.msra.mxu0 %v1728
    %1772 = vmatprep.subr.bf16.mxu0 0
    %1773 = vmatpush1.bf16.msra.mxu0 %v1729
    %1774 = vmatprep.subr.bf16.mxu0 0
    %1775 = vmatpush1.bf16.msra.mxu0 %v1730
    %1776 = vmatprep.subr.bf16.mxu0 0
    %1777 = vmatpush1.bf16.msra.mxu0 %v1731
    %1778 = vmatprep.subr.bf16.mxu0 0
    %1779 = vmatpush1.bf16.msra.mxu0 %v1732
    %1780 = vmatprep.subr.bf16.mxu0 0
    %1781 = vmatpush1.bf16.msra.mxu0 %v1733
    %1782 = vmatprep.mubr.bf16.mxu0 %v1614
    %1783 = vmatmul.mubr.bf16.gmra.mrb[0].mxu0 %v1613
    %v1784 = vpop.f32.mrb[0].mxu0
    %v1785 = vadd.f32 %v1652, %v1784
    %v1786 = vpop.f32.mrb[0].mxu0
    %v1787 = vpop.f32.mrb[0].mxu0
    %v1788 = vpop.f32.mrb[0].mxu0
    %1789 = vdwg.mxu0
    %v1790 = vmax.f32 %v1785, 0.0
    %v1791 = vpack.c.bf16 %v1790, %v1790
    %v1792 = vld [vmem:[%s5] sm:$0xf]
    %v1793 = vld [vmem:[%s5 + $0x4] sm:$0xf]
    %v1794 = vld [vmem:[%s5 + $0x8] sm:$0xf]
    %v1795 = vld [vmem:[%s5 + $0xc] sm:$0xf]
    %v1796 = vld [vmem:[%s5 + $0x10] sm:$0xf]
    %v1797 = vld [vmem:[%s5 + $0x14] sm:$0xf]
    %v1798 = vld [vmem:[%s5 + $0x18] sm:$0xf]
    %v1799 = vld [vmem:[%s5 + $0x1c] sm:$0xf]
    %v1800 = vld [vmem:[%s5 + $0x20] sm:$0xf]
    %v1801 = vld [vmem:[%s5 + $0x24] sm:$0xf]
    %v1802 = vld [vmem:[%s5 + $0x28] sm:$0xf]
    %v1803 = vld [vmem:[%s5 + $0x2c] sm:$0xf]
    %v1804 = vld [vmem:[%s5 + $0x30] sm:$0xf]
    %v1805 = vld [vmem:[%s5 + $0x34] sm:$0xf]
    %v1806 = vld [vmem:[%s5 + $0x38] sm:$0xf]
    %v1807 = vld [vmem:[%s5 + $0x3c] sm:$0xf]
    %v1808 = vld [vmem:[#allocation8] sm:$0x1]
    %v1810 = vlaneseq
    %v1811 = vshrl.u32 %v1810, 7
    %v1812 = vsub.s32 0, %v1811
    %v1813 = vrot.slane %v1808, %v1812
    %v1831 = vunpack.c.l.b16 %v1792
    %v1832 = vunpack.c.l.b16 %v1793
    %v1833 = vunpack.c.l.b16 %v1794
    %v1834 = vunpack.c.l.b16 %v1795
    %v1835 = vunpack.c.l.b16 %v1796
    %v1836 = vunpack.c.l.b16 %v1797
    %v1837 = vunpack.c.l.b16 %v1798
    %v1838 = vunpack.c.l.b16 %v1799
    %v1839 = vunpack.c.l.b16 %v1800
    %v1840 = vunpack.c.l.b16 %v1801
    %v1841 = vunpack.c.l.b16 %v1802
    %v1842 = vunpack.c.l.b16 %v1803
    %v1843 = vunpack.c.l.b16 %v1804
    %v1844 = vunpack.c.l.b16 %v1805
    %v1845 = vunpack.c.l.b16 %v1806
    %v1846 = vunpack.c.l.b16 %v1807
    %v1847 = vpack.c.b16 %v1832, %v1831
    %v1848 = vpack.c.b16 %v1834, %v1833
    %v1849 = vpack.c.b16 %v1836, %v1835
    %v1850 = vpack.c.b16 %v1838, %v1837
    %v1851 = vpack.c.b16 %v1840, %v1839
    %v1852 = vpack.c.b16 %v1842, %v1841
    %v1853 = vpack.c.b16 %v1844, %v1843
    %v1854 = vpack.c.b16 %v1846, %v1845
    %1863 = vmatprep.subr.bf16.mxu0 0
    %1864 = vmatpush1.bf16.msra.mxu0 %v1847
    %1865 = vmatprep.subr.bf16.mxu0 0
    %1866 = vmatpush1.bf16.msra.mxu0 %v1848
    %1867 = vmatprep.subr.bf16.mxu0 0
    %1868 = vmatpush1.bf16.msra.mxu0 %v1849
    %1869 = vmatprep.subr.bf16.mxu0 0
    %1870 = vmatpush1.bf16.msra.mxu0 %v1850
    %1871 = vmatprep.subr.bf16.mxu0 0
    %1872 = vmatpush1.bf16.msra.mxu0 %v1851
    %1873 = vmatprep.subr.bf16.mxu0 0
    %1874 = vmatpush1.bf16.msra.mxu0 %v1852
    %1875 = vmatprep.subr.bf16.mxu0 0
    %1876 = vmatpush1.bf16.msra.mxu0 %v1853
    %1877 = vmatprep.subr.bf16.mxu0 0
    %1878 = vmatpush1.bf16.msra.mxu0 %v1854
    %1879 = vmatprep.subr.bf16.mxu0 0
    %1880 = vmatpush1.bf16.msra.mxu0 0
    %1881 = vmatprep.subr.bf16.mxu0 0
    %1882 = vmatpush1.bf16.msra.mxu0 0
    %1883 = vmatprep.subr.bf16.mxu0 0
    %1884 = vmatpush1.bf16.msra.mxu0 0
    %1885 = vmatprep.subr.bf16.mxu0 0
    %1886 = vmatpush1.bf16.msra.mxu0 0
    %1887 = vmatprep.subr.bf16.mxu0 0
    %1888 = vmatpush1.bf16.msra.mxu0 0
    %1889 = vmatprep.subr.bf16.mxu0 0
    %1890 = vmatpush1.bf16.msra.mxu0 0
    %1891 = vmatprep.subr.bf16.mxu0 0
    %1892 = vmatpush1.bf16.msra.mxu0 0
    %1893 = vmatprep.subr.bf16.mxu0 0
    %1894 = vmatpush1.bf16.msra.mxu0 0
    %1895 = vmatprep.mubr.bf16.mxu0 0
    %1896 = vmatmul.mubr.bf16.gmra.mrb[0].mxu0 %v1791
    %v1897 = vpop.f32.mrb[0].mxu0
    %v1898 = vadd.f32 %v1813, %v1897
    %v1899 = vpop.f32.mrb[0].mxu0
    %v1900 = vpop.f32.mrb[0].mxu0
    %v1901 = vpop.f32.mrb[0].mxu0
    %1902 = vdwg.mxu0
    %v1903 = vxor.u32 %v1898, 2147483648
    %v1904 = vmul.f32 %v1903, 1.442695
    %v1905 = vpow.pop %v1904
    %v1906 = vadd.f32 %v1905, 1.0
    %v1907 = vrcp.pop %v1906
    %v1908 = vmul.f32 1.0, %v1907
    %v1909 = vpack.c.bf16 %v1908, %v1908
    %v1910 = vld [vmem:[%s7] sm:$0xff]
    %v1911 = vld [vmem:[%s7 + $0x8] sm:$0xff]
    %v1912 = vld [vmem:[%s7 + $0x10] sm:$0xff]
    %v1913 = vld [vmem:[%s7 + $0x18] sm:$0xff]
    %v1914 = vld [vmem:[%s7 + $0x20] sm:$0xff]
    %v1915 = vld [vmem:[%s7 + $0x28] sm:$0xff]
    %v1916 = vld [vmem:[%s7 + $0x30] sm:$0xf]
    %v1917 = vld [vmem:[%s7 + $0x34] sm:$0xff]
    %v1918 = vld [vmem:[%s7 + $0x3c] sm:$0xff]
    %v1919 = vld [vmem:[%s7 + $0x44] sm:$0xff]
    %v1920 = vld [vmem:[%s7 + $0x4c] sm:$0xff]
    %v1921 = vld [vmem:[%s7 + $0x54] sm:$0xff]
    %v1922 = vld [vmem:[%s7 + $0x5c] sm:$0xff]
    %v1923 = vld [vmem:[%s7 + $0x64] sm:$0xf]
    %v1924 = vld [vmem:[%s7 + $0x68] sm:$0xff]
    %v1925 = vld [vmem:[%s7 + $0x70] sm:$0xff]
    %v1926 = vld [vmem:[%s7 + $0x78] sm:$0xff]
    %v1927 = vld [vmem:[%s7 + $0x80] sm:$0xff]
    %v1928 = vld [vmem:[%s7 + $0x88] sm:$0xff]
    %v1929 = vld [vmem:[%s7 + $0x90] sm:$0xff]
    %v1930 = vld [vmem:[%s7 + $0x98] sm:$0xf]
    %v1931 = vld [vmem:[%s7 + $0x9c] sm:$0xff]
    %v1932 = vld [vmem:[%s7 + $0xa4] sm:$0xff]
    %v1933 = vld [vmem:[%s7 + $0xac] sm:$0xff]
    %v1934 = vld [vmem:[%s7 + $0xb4] sm:$0xff]
    %v1935 = vld [vmem:[%s7 + $0xbc] sm:$0xff]
    %v1936 = vld [vmem:[%s7 + $0xc4] sm:$0xff]
    %v1937 = vld [vmem:[%s7 + $0xcc] sm:$0xf]
    %v1938 = vld [vmem:[%s7 + $0xd0] sm:$0xff]
    %v1939 = vld [vmem:[%s7 + $0xd8] sm:$0xff]
    %v1940 = vld [vmem:[%s7 + $0xe0] sm:$0xff]
    %v1941 = vld [vmem:[%s7 + $0xe8] sm:$0xff]
    %v1942 = vld [vmem:[%s7 + $0xf0] sm:$0xff]
    %v1943 = vld [vmem:[%s7 + $0xf8] sm:$0xff]
    %v1944 = vld [vmem:[%s7 + $0x100] sm:$0xf]
    %v1945 = vld [vmem:[%s7 + $0x104] sm:$0xff]
    %v1946 = vld [vmem:[%s7 + $0x10c] sm:$0xff]
    %v1947 = vld [vmem:[%s7 + $0x114] sm:$0xff]
    %v1948 = vld [vmem:[%s7 + $0x11c] sm:$0xff]
    %v1949 = vld [vmem:[%s7 + $0x124] sm:$0xff]
    %v1950 = vld [vmem:[%s7 + $0x12c] sm:$0xff]
    %v1951 = vld [vmem:[%s7 + $0x134] sm:$0xf]
    %v1952 = vld [vmem:[%s7 + $0x138] sm:$0xff]
    %v1953 = vld [vmem:[%s7 + $0x140] sm:$0xff]
    %v1954 = vld [vmem:[%s7 + $0x148] sm:$0xff]
    %v1955 = vld [vmem:[%s7 + $0x150] sm:$0xff]
    %v1956 = vld [vmem:[%s7 + $0x158] sm:$0xff]
    %v1957 = vld [vmem:[%s7 + $0x160] sm:$0xff]
    %v1958 = vld [vmem:[%s7 + $0x168] sm:$0xf]
    %v1959 = vld [vmem:[%s7 + $0x16c] sm:$0xff]
    %v1960 = vld [vmem:[%s7 + $0x174] sm:$0xff]
    %v1961 = vld [vmem:[%s7 + $0x17c] sm:$0xff]
    %v1962 = vld [vmem:[%s7 + $0x184] sm:$0xff]
    %v1963 = vld [vmem:[%s7 + $0x18c] sm:$0xff]
    %v1964 = vld [vmem:[%s7 + $0x194] sm:$0xff]
    %v1965 = vld [vmem:[%s7 + $0x19c] sm:$0xf]
    %v1966 = vld [vmem:[%s7 + $0x1a0] sm:$0xff]
    %v1967 = vld [vmem:[%s7 + $0x1a8] sm:$0xff]
    %v1968 = vld [vmem:[%s7 + $0x1b0] sm:$0xff]
    %v1969 = vld [vmem:[%s7 + $0x1b8] sm:$0xff]
    %v1970 = vld [vmem:[%s7 + $0x1c0] sm:$0xff]
    %v1971 = vld [vmem:[%s7 + $0x1c8] sm:$0xff]
    %v1972 = vld [vmem:[%s7 + $0x1d0] sm:$0xf]
    %v1973 = vld [vmem:[%s7 + $0x1d4] sm:$0xff]
    %v1974 = vld [vmem:[%s7 + $0x1dc] sm:$0xff]
    %v1975 = vld [vmem:[%s7 + $0x1e4] sm:$0xff]
    %v1976 = vld [vmem:[%s7 + $0x1ec] sm:$0xff]
    %v1977 = vld [vmem:[%s7 + $0x1f4] sm:$0xff]
    %v1978 = vld [vmem:[%s7 + $0x1fc] sm:$0xff]
    %v1979 = vld [vmem:[%s7 + $0x204] sm:$0xf]
    %v1980 = vld [vmem:[%s7 + $0x208] sm:$0xff]
    %v1981 = vld [vmem:[%s7 + $0x210] sm:$0xff]
    %v1982 = vld [vmem:[%s7 + $0x218] sm:$0xff]
    %v1983 = vld [vmem:[%s7 + $0x220] sm:$0xff]
    %v1984 = vld [vmem:[%s7 + $0x228] sm:$0xff]
    %v1985 = vld [vmem:[%s7 + $0x230] sm:$0xff]
    %v1986 = vld [vmem:[%s7 + $0x238] sm:$0xf]
    %v1987 = vld [vmem:[%s7 + $0x23c] sm:$0xff]
    %v1988 = vld [vmem:[%s7 + $0x244] sm:$0xff]
    %v1989 = vld [vmem:[%s7 + $0x24c] sm:$0xff]
    %v1990 = vld [vmem:[%s7 + $0x254] sm:$0xff]
    %v1991 = vld [vmem:[%s7 + $0x25c] sm:$0xff]
    %v1992 = vld [vmem:[%s7 + $0x264] sm:$0xff]
    %v1993 = vld [vmem:[%s7 + $0x26c] sm:$0xf]
    %v1994 = vld [vmem:[%s7 + $0x270] sm:$0xff]
    %v1995 = vld [vmem:[%s7 + $0x278] sm:$0xff]
    %v1996 = vld [vmem:[%s7 + $0x280] sm:$0xff]
    %v1997 = vld [vmem:[%s7 + $0x288] sm:$0xff]
    %v1998 = vld [vmem:[%s7 + $0x290] sm:$0xff]
    %v1999 = vld [vmem:[%s7 + $0x298] sm:$0xff]
    %v2000 = vld [vmem:[%s7 + $0x2a0] sm:$0xf]
    %v2001 = vld [vmem:[%s7 + $0x2a4] sm:$0xff]
    %v2002 = vld [vmem:[%s7 + $0x2ac] sm:$0xff]
    %v2003 = vld [vmem:[%s7 + $0x2b4] sm:$0xff]
    %v2004 = vld [vmem:[%s7 + $0x2bc] sm:$0xff]
    %v2005 = vld [vmem:[%s7 + $0x2c4] sm:$0xff]
    %v2006 = vld [vmem:[%s7 + $0x2cc] sm:$0xff]
    %v2007 = vld [vmem:[%s7 + $0x2d4] sm:$0xf]
    %v2008 = vld [vmem:[%s7 + $0x2d8] sm:$0xff]
    %v2009 = vld [vmem:[%s7 + $0x2e0] sm:$0xff]
    %v2010 = vld [vmem:[%s7 + $0x2e8] sm:$0xff]
    %v2011 = vld [vmem:[%s7 + $0x2f0] sm:$0xff]
    %v2012 = vld [vmem:[%s7 + $0x2f8] sm:$0xff]
    %v2013 = vld [vmem:[%s7 + $0x300] sm:$0xff]
    %v2014 = vld [vmem:[%s7 + $0x308] sm:$0xf]
    %v2015 = vld [vmem:[%s7 + $0x30c] sm:$0xff]
    %v2016 = vld [vmem:[%s7 + $0x314] sm:$0xff]
    %v2017 = vld [vmem:[%s7 + $0x31c] sm:$0xff]
    %v2018 = vld [vmem:[%s7 + $0x324] sm:$0xff]
    %v2019 = vld [vmem:[%s7 + $0x32c] sm:$0xff]
    %v2020 = vld [vmem:[%s7 + $0x334] sm:$0xff]
    %v2021 = vld [vmem:[%s7 + $0x33c] sm:$0xf]
    %v2134 = vunpack.c.l.b16 %v1910
    %v2135 = vunpack.c.h.b16 %v1910
    %v2136 = vunpack.c.l.b16 %v1911
    %v2137 = vunpack.c.h.b16 %v1911
    %v2138 = vunpack.c.l.b16 %v1912
    %v2139 = vunpack.c.h.b16 %v1912
    %v2140 = vunpack.c.l.b16 %v1913
    %v2141 = vunpack.c.h.b16 %v1913
    %v2142 = vunpack.c.l.b16 %v1914
    %v2143 = vunpack.c.h.b16 %v1914
    %v2144 = vunpack.c.l.b16 %v1915
    %v2145 = vunpack.c.h.b16 %v1915
    %v2146 = vunpack.c.l.b16 %v1916
    %v2147 = vunpack.c.l.b16 %v1917
    %v2148 = vunpack.c.h.b16 %v1917
    %v2149 = vunpack.c.l.b16 %v1918
    %v2150 = vunpack.c.h.b16 %v1918
    %v2151 = vunpack.c.l.b16 %v1919
    %v2152 = vunpack.c.h.b16 %v1919
    %v2153 = vunpack.c.l.b16 %v1920
    %v2154 = vunpack.c.h.b16 %v1920
    %v2155 = vunpack.c.l.b16 %v1921
    %v2156 = vunpack.c.h.b16 %v1921
    %v2157 = vunpack.c.l.b16 %v1922
    %v2158 = vunpack.c.h.b16 %v1922
    %v2159 = vunpack.c.l.b16 %v1923
    %v2160 = vunpack.c.l.b16 %v1924
    %v2161 = vunpack.c.h.b16 %v1924
    %v2162 = vunpack.c.l.b16 %v1925
    %v2163 = vunpack.c.h.b16 %v1925
    %v2164 = vunpack.c.l.b16 %v1926
    %v2165 = vunpack.c.h.b16 %v1926
    %v2166 = vunpack.c.l.b16 %v1927
    %v2167 = vunpack.c.h.b16 %v1927
    %v2168 = vunpack.c.l.b16 %v1928
    %v2169 = vunpack.c.h.b16 %v1928
    %v2170 = vunpack.c.l.b16 %v1929
    %v2171 = vunpack.c.h.b16 %v1929
    %v2172 = vunpack.c.l.b16 %v1930
    %v2173 = vunpack.c.l.b16 %v1931
    %v2174 = vunpack.c.h.b16 %v1931
    %v2175 = vunpack.c.l.b16 %v1932
    %v2176 = vunpack.c.h.b16 %v1932
    %v2177 = vunpack.c.l.b16 %v1933
    %v2178 = vunpack.c.h.b16 %v1933
    %v2179 = vunpack.c.l.b16 %v1934
    %v2180 = vunpack.c.h.b16 %v1934
    %v2181 = vunpack.c.l.b16 %v1935
    %v2182 = vunpack.c.h.b16 %v1935
    %v2183 = vunpack.c.l.b16 %v1936
    %v2184 = vunpack.c.h.b16 %v1936
    %v2185 = vunpack.c.l.b16 %v1937
    %v2186 = vunpack.c.l.b16 %v1938
    %v2187 = vunpack.c.h.b16 %v1938
    %v2188 = vunpack.c.l.b16 %v1939
    %v2189 = vunpack.c.h.b16 %v1939
    %v2190 = vunpack.c.l.b16 %v1940
    %v2191 = vunpack.c.h.b16 %v1940
    %v2192 = vunpack.c.l.b16 %v1941
    %v2193 = vunpack.c.h.b16 %v1941
    %v2194 = vunpack.c.l.b16 %v1942
    %v2195 = vunpack.c.h.b16 %v1942
    %v2196 = vunpack.c.l.b16 %v1943
    %v2197 = vunpack.c.h.b16 %v1943
    %v2198 = vunpack.c.l.b16 %v1944
    %v2199 = vunpack.c.l.b16 %v1945
    %v2200 = vunpack.c.h.b16 %v1945
    %v2201 = vunpack.c.l.b16 %v1946
    %v2202 = vunpack.c.h.b16 %v1946
    %v2203 = vunpack.c.l.b16 %v1947
    %v2204 = vunpack.c.h.b16 %v1947
    %v2205 = vunpack.c.l.b16 %v1948
    %v2206 = vunpack.c.h.b16 %v1948
    %v2207 = vunpack.c.l.b16 %v1949
    %v2208 = vunpack.c.h.b16 %v1949
    %v2209 = vunpack.c.l.b16 %v1950
    %v2210 = vunpack.c.h.b16 %v1950
    %v2211 = vunpack.c.l.b16 %v1951
    %v2212 = vunpack.c.l.b16 %v1952
    %v2213 = vunpack.c.h.b16 %v1952
    %v2214 = vunpack.c.l.b16 %v1953
    %v2215 = vunpack.c.h.b16 %v1953
    %v2216 = vunpack.c.l.b16 %v1954
    %v2217 = vunpack.c.h.b16 %v1954
    %v2218 = vunpack.c.l.b16 %v1955
    %v2219 = vunpack.c.h.b16 %v1955
    %v2220 = vunpack.c.l.b16 %v1956
    %v2221 = vunpack.c.h.b16 %v1956
    %v2222 = vunpack.c.l.b16 %v1957
    %v2223 = vunpack.c.h.b16 %v1957
    %v2224 = vunpack.c.l.b16 %v1958
    %v2225 = vunpack.c.l.b16 %v1959
    %v2226 = vunpack.c.h.b16 %v1959
    %v2227 = vunpack.c.l.b16 %v1960
    %v2228 = vunpack.c.h.b16 %v1960
    %v2229 = vunpack.c.l.b16 %v1961
    %v2230 = vunpack.c.h.b16 %v1961
    %v2231 = vunpack.c.l.b16 %v1962
    %v2232 = vunpack.c.h.b16 %v1962
    %v2233 = vunpack.c.l.b16 %v1963
    %v2234 = vunpack.c.h.b16 %v1963
    %v2235 = vunpack.c.l.b16 %v1964
    %v2236 = vunpack.c.h.b16 %v1964
    %v2237 = vunpack.c.l.b16 %v1965
    %v2238 = vunpack.c.l.b16 %v1966
    %v2239 = vunpack.c.h.b16 %v1966
    %v2240 = vunpack.c.l.b16 %v1967
    %v2241 = vunpack.c.h.b16 %v1967
    %v2242 = vunpack.c.l.b16 %v1968
    %v2243 = vunpack.c.h.b16 %v1968
    %v2244 = vunpack.c.l.b16 %v1969
    %v2245 = vunpack.c.h.b16 %v1969
    %v2246 = vunpack.c.l.b16 %v1970
    %v2247 = vunpack.c.h.b16 %v1970
    %v2248 = vunpack.c.l.b16 %v1971
    %v2249 = vunpack.c.h.b16 %v1971
    %v2250 = vunpack.c.l.b16 %v1972
    %v2251 = vunpack.c.l.b16 %v1973
    %v2252 = vunpack.c.h.b16 %v1973
    %v2253 = vunpack.c.l.b16 %v1974
    %v2254 = vunpack.c.h.b16 %v1974
    %v2255 = vunpack.c.l.b16 %v1975
    %v2256 = vunpack.c.h.b16 %v1975
    %v2257 = vunpack.c.l.b16 %v1976
    %v2258 = vunpack.c.h.b16 %v1976
    %v2259 = vunpack.c.l.b16 %v1977
    %v2260 = vunpack.c.h.b16 %v1977
    %v2261 = vunpack.c.l.b16 %v1978
    %v2262 = vunpack.c.h.b16 %v1978
    %v2263 = vunpack.c.l.b16 %v1979
    %v2264 = vunpack.c.l.b16 %v1980
    %v2265 = vunpack.c.h.b16 %v1980
    %v2266 = vunpack.c.l.b16 %v1981
    %v2267 = vunpack.c.h.b16 %v1981
    %v2268 = vunpack.c.l.b16 %v1982
    %v2269 = vunpack.c.h.b16 %v1982
    %v2270 = vunpack.c.l.b16 %v1983
    %v2271 = vunpack.c.h.b16 %v1983
    %v2272 = vunpack.c.l.b16 %v1984
    %v2273 = vunpack.c.h.b16 %v1984
    %v2274 = vunpack.c.l.b16 %v1985
    %v2275 = vunpack.c.h.b16 %v1985
    %v2276 = vunpack.c.l.b16 %v1986
    %v2277 = vunpack.c.l.b16 %v1987
    %v2278 = vunpack.c.h.b16 %v1987
    %v2279 = vunpack.c.l.b16 %v1988
    %v2280 = vunpack.c.h.b16 %v1988
    %v2281 = vunpack.c.l.b16 %v1989
    %v2282 = vunpack.c.h.b16 %v1989
    %v2283 = vunpack.c.l.b16 %v1990
    %v2284 = vunpack.c.h.b16 %v1990
    %v2285 = vunpack.c.l.b16 %v1991
    %v2286 = vunpack.c.h.b16 %v1991
    %v2287 = vunpack.c.l.b16 %v1992
    %v2288 = vunpack.c.h.b16 %v1992
    %v2289 = vunpack.c.l.b16 %v1993
    %v2290 = vunpack.c.l.b16 %v1994
    %v2291 = vunpack.c.h.b16 %v1994
    %v2292 = vunpack.c.l.b16 %v1995
    %v2293 = vunpack.c.h.b16 %v1995
    %v2294 = vunpack.c.l.b16 %v1996
    %v2295 = vunpack.c.h.b16 %v1996
    %v2296 = vunpack.c.l.b16 %v1997
    %v2297 = vunpack.c.h.b16 %v1997
    %v2298 = vunpack.c.l.b16 %v1998
    %v2299 = vunpack.c.h.b16 %v1998
    %v2300 = vunpack.c.l.b16 %v1999
    %v2301 = vunpack.c.h.b16 %v1999
    %v2302 = vunpack.c.l.b16 %v2000
    %v2303 = vunpack.c.l.b16 %v2001
    %v2304 = vunpack.c.h.b16 %v2001
    %v2305 = vunpack.c.l.b16 %v2002
    %v2306 = vunpack.c.h.b16 %v2002
    %v2307 = vunpack.c.l.b16 %v2003
    %v2308 = vunpack.c.h.b16 %v2003
    %v2309 = vunpack.c.l.b16 %v2004
    %v2310 = vunpack.c.h.b16 %v2004
    %v2311 = vunpack.c.l.b16 %v2005
    %v2312 = vunpack.c.h.b16 %v2005
    %v2313 = vunpack.c.l.b16 %v2006
    %v2314 = vunpack.c.h.b16 %v2006
    %v2315 = vunpack.c.l.b16 %v2007
    %v2316 = vunpack.c.l.b16 %v2008
    %v2317 = vunpack.c.h.b16 %v2008
    %v2318 = vunpack.c.l.b16 %v2009
    %v2319 = vunpack.c.h.b16 %v2009
    %v2320 = vunpack.c.l.b16 %v2010
    %v2321 = vunpack.c.h.b16 %v2010
    %v2322 = vunpack.c.l.b16 %v2011
    %v2323 = vunpack.c.h.b16 %v2011
    %v2324 = vunpack.c.l.b16 %v2012
    %v2325 = vunpack.c.h.b16 %v2012
    %v2326 = vunpack.c.l.b16 %v2013
    %v2327 = vunpack.c.h.b16 %v2013
    %v2328 = vunpack.c.l.b16 %v2014
    %v2329 = vunpack.c.l.b16 %v2015
    %v2330 = vunpack.c.h.b16 %v2015
    %v2331 = vunpack.c.l.b16 %v2016
    %v2332 = vunpack.c.h.b16 %v2016
    %v2333 = vunpack.c.l.b16 %v2017
    %v2334 = vunpack.c.h.b16 %v2017
    %v2335 = vunpack.c.l.b16 %v2018
    %v2336 = vunpack.c.h.b16 %v2018
    %v2337 = vunpack.c.l.b16 %v2019
    %v2338 = vunpack.c.h.b16 %v2019
    %v2339 = vunpack.c.l.b16 %v2020
    %v2340 = vunpack.c.h.b16 %v2020
    %v2341 = vunpack.c.l.b16 %v2021
    %v2342 = vpack.c.b16 %v2147, %v2134
    %v2343 = vpack.c.b16 %v2148, %v2135
    %v2344 = vpack.c.b16 %v2149, %v2136
    %v2345 = vpack.c.b16 %v2150, %v2137
    %v2346 = vpack.c.b16 %v2151, %v2138
    %v2347 = vpack.c.b16 %v2152, %v2139
    %v2348 = vpack.c.b16 %v2153, %v2140
    %v2349 = vpack.c.b16 %v2154, %v2141
    %v2350 = vpack.c.b16 %v2155, %v2142
    %v2351 = vpack.c.b16 %v2156, %v2143
    %v2352 = vpack.c.b16 %v2157, %v2144
    %v2353 = vpack.c.b16 %v2158, %v2145
    %v2354 = vpack.c.b16 %v2159, %v2146
    %v2355 = vpack.c.b16 %v2173, %v2160
    %v2356 = vpack.c.b16 %v2174, %v2161
    %v2357 = vpack.c.b16 %v2175, %v2162
    %v2358 = vpack.c.b16 %v2176, %v2163
    %v2359 = vpack.c.b16 %v2177, %v2164
    %v2360 = vpack.c.b16 %v2178, %v2165
    %v2361 = vpack.c.b16 %v2179, %v2166
    %v2362 = vpack.c.b16 %v2180, %v2167
    %v2363 = vpack.c.b16 %v2181, %v2168
    %v2364 = vpack.c.b16 %v2182, %v2169
    %v2365 = vpack.c.b16 %v2183, %v2170
    %v2366 = vpack.c.b16 %v2184, %v2171
    %v2367 = vpack.c.b16 %v2185, %v2172
    %v2368 = vpack.c.b16 %v2199, %v2186
    %v2369 = vpack.c.b16 %v2200, %v2187
    %v2370 = vpack.c.b16 %v2201, %v2188
    %v2371 = vpack.c.b16 %v2202, %v2189
    %v2372 = vpack.c.b16 %v2203, %v2190
    %v2373 = vpack.c.b16 %v2204, %v2191
    %v2374 = vpack.c.b16 %v2205, %v2192
    %v2375 = vpack.c.b16 %v2206, %v2193
    %v2376 = vpack.c.b16 %v2207, %v2194
    %v2377 = vpack.c.b16 %v2208, %v2195
    %v2378 = vpack.c.b16 %v2209, %v2196
    %v2379 = vpack.c.b16 %v2210, %v2197
    %v2380 = vpack.c.b16 %v2211, %v2198
    %v2381 = vpack.c.b16 %v2225, %v2212
    %v2382 = vpack.c.b16 %v2226, %v2213
    %v2383 = vpack.c.b16 %v2227, %v2214
    %v2384 = vpack.c.b16 %v2228, %v2215
    %v2385 = vpack.c.b16 %v2229, %v2216
    %v2386 = vpack.c.b16 %v2230, %v2217
    %v2387 = vpack.c.b16 %v2231, %v2218
    %v2388 = vpack.c.b16 %v2232, %v2219
    %v2389 = vpack.c.b16 %v2233, %v2220
    %v2390 = vpack.c.b16 %v2234, %v2221
    %v2391 = vpack.c.b16 %v2235, %v2222
    %v2392 = vpack.c.b16 %v2236, %v2223
    %v2393 = vpack.c.b16 %v2237, %v2224
    %v2394 = vpack.c.b16 %v2251, %v2238
    %v2395 = vpack.c.b16 %v2252, %v2239
    %v2396 = vpack.c.b16 %v2253, %v2240
    %v2397 = vpack.c.b16 %v2254, %v2241
    %v2398 = vpack.c.b16 %v2255, %v2242
    %v2399 = vpack.c.b16 %v2256, %v2243
    %v2400 = vpack.c.b16 %v2257, %v2244
    %v2401 = vpack.c.b16 %v2258, %v2245
    %v2402 = vpack.c.b16 %v2259, %v2246
    %v2403 = vpack.c.b16 %v2260, %v2247
    %v2404 = vpack.c.b16 %v2261, %v2248
    %v2405 = vpack.c.b16 %v2262, %v2249
    %v2406 = vpack.c.b16 %v2263, %v2250
    %v2407 = vpack.c.b16 %v2277, %v2264
    %v2408 = vpack.c.b16 %v2278, %v2265
    %v2409 = vpack.c.b16 %v2279, %v2266
    %v2410 = vpack.c.b16 %v2280, %v2267
    %v2411 = vpack.c.b16 %v2281, %v2268
    %v2412 = vpack.c.b16 %v2282, %v2269
    %v2413 = vpack.c.b16 %v2283, %v2270
    %v2414 = vpack.c.b16 %v2284, %v2271
    %v2415 = vpack.c.b16 %v2285, %v2272
    %v2416 = vpack.c.b16 %v2286, %v2273
    %v2417 = vpack.c.b16 %v2287, %v2274
    %v2418 = vpack.c.b16 %v2288, %v2275
    %v2419 = vpack.c.b16 %v2289, %v2276
    %v2420 = vpack.c.b16 %v2303, %v2290
    %v2421 = vpack.c.b16 %v2304, %v2291
    %v2422 = vpack.c.b16 %v2305, %v2292
    %v2423 = vpack.c.b16 %v2306, %v2293
    %v2424 = vpack.c.b16 %v2307, %v2294
    %v2425 = vpack.c.b16 %v2308, %v2295
    %v2426 = vpack.c.b16 %v2309, %v2296
    %v2427 = vpack.c.b16 %v2310, %v2297
    %v2428 = vpack.c.b16 %v2311, %v2298
    %v2429 = vpack.c.b16 %v2312, %v2299
    %v2430 = vpack.c.b16 %v2313, %v2300
    %v2431 = vpack.c.b16 %v2314, %v2301
    %v2432 = vpack.c.b16 %v2315, %v2302
    %v2433 = vpack.c.b16 %v2329, %v2316
    %v2434 = vpack.c.b16 %v2330, %v2317
    %v2435 = vpack.c.b16 %v2331, %v2318
    %v2436 = vpack.c.b16 %v2332, %v2319
    %v2437 = vpack.c.b16 %v2333, %v2320
    %v2438 = vpack.c.b16 %v2334, %v2321
    %v2439 = vpack.c.b16 %v2335, %v2322
    %v2440 = vpack.c.b16 %v2336, %v2323
    %v2441 = vpack.c.b16 %v2337, %v2324
    %v2442 = vpack.c.b16 %v2338, %v2325
    %v2443 = vpack.c.b16 %v2339, %v2326
    %v2444 = vpack.c.b16 %v2340, %v2327
    %v2445 = vpack.c.b16 %v2341, %v2328
    %2550 = vmatprep.subr.bf16.mxu0 %v2343
    %2551 = vmatpush1.bf16.msra.mxu0 %v2342
    %2552 = vmatprep.subr.bf16.mxu0 %v2356
    %2553 = vmatpush1.bf16.msra.mxu0 %v2355
    %2554 = vmatprep.subr.bf16.mxu0 %v2369
    %2555 = vmatpush1.bf16.msra.mxu0 %v2368
    %2556 = vmatprep.subr.bf16.mxu0 %v2382
    %2557 = vmatpush1.bf16.msra.mxu0 %v2381
    %2558 = vmatprep.subr.bf16.mxu0 %v2395
    %2559 = vmatpush1.bf16.msra.mxu0 %v2394
    %2560 = vmatprep.subr.bf16.mxu0 %v2408
    %2561 = vmatpush1.bf16.msra.mxu0 %v2407
    %2562 = vmatprep.subr.bf16.mxu0 %v2421
    %2563 = vmatpush1.bf16.msra.mxu0 %v2420
    %2564 = vmatprep.subr.bf16.mxu0 %v2434
    %2565 = vmatpush1.bf16.msra.mxu0 %v2433
    %2566 = vmatprep.subr.bf16.mxu0 0
    %2567 = vmatpush1.bf16.msra.mxu0 0
    %2568 = vmatprep.subr.bf16.mxu0 0
    %2569 = vmatpush1.bf16.msra.mxu0 0
    %2570 = vmatprep.subr.bf16.mxu0 0
    %2571 = vmatpush1.bf16.msra.mxu0 0
    %2572 = vmatprep.subr.bf16.mxu0 0
    %2573 = vmatpush1.bf16.msra.mxu0 0
    %2574 = vmatprep.subr.bf16.mxu0 0
    %2575 = vmatpush1.bf16.msra.mxu0 0
    %2576 = vmatprep.subr.bf16.mxu0 0
    %2577 = vmatpush1.bf16.msra.mxu0 0
    %2578 = vmatprep.subr.bf16.mxu0 0
    %2579 = vmatpush1.bf16.msra.mxu0 0
    %2580 = vmatprep.subr.bf16.mxu0 0
    %2581 = vmatpush1.bf16.msra.mxu0 0
    %2582 = vmatprep.mubr.bf16.mxu0 0
    %2583 = vmatmul.mubr.bf16.gmra.mrb[0].mxu0 %v1909
    %v2584 = vpop.f32.mrb[0].mxu0
    %v2585 = vadd.f32 0.0, %v2584
    %v2586 = vpop.f32.mrb[0].mxu0
    %v2587 = vadd.f32 0.0, %v2586
    %v2588 = vpop.f32.mrb[0].mxu0
    %v2589 = vpop.f32.mrb[0].mxu0
    %2590 = vdwg.mxu0
    %2591 = vmatprep.subr.bf16.mxu0 %v2345
    %2592 = vmatpush1.bf16.msra.mxu0 %v2344
    %2593 = vmatprep.subr.bf16.mxu0 %v2358
    %2594 = vmatpush1.bf16.msra.mxu0 %v2357
    %2595 = vmatprep.subr.bf16.mxu0 %v2371
    %2596 = vmatpush1.bf16.msra.mxu0 %v2370
    %2597 = vmatprep.subr.bf16.mxu0 %v2384
    %2598 = vmatpush1.bf16.msra.mxu0 %v2383
    %2599 = vmatprep.subr.bf16.mxu0 %v2397
    %2600 = vmatpush1.bf16.msra.mxu0 %v2396
    %2601 = vmatprep.subr.bf16.mxu0 %v2410
    %2602 = vmatpush1.bf16.msra.mxu0 %v2409
    %2603 = vmatprep.subr.bf16.mxu0 %v2423
    %2604 = vmatpush1.bf16.msra.mxu0 %v2422
    %2605 = vmatprep.subr.bf16.mxu0 %v2436
    %2606 = vmatpush1.bf16.msra.mxu0 %v2435
    %2607 = vmatprep.subr.bf16.mxu0 0
    %2608 = vmatpush1.bf16.msra.mxu0 0
    %2609 = vmatprep.subr.bf16.mxu0 0
    %2610 = vmatpush1.bf16.msra.mxu0 0
    %2611 = vmatprep.subr.bf16.mxu0 0
    %2612 = vmatpush1.bf16.msra.mxu0 0
    %2613 = vmatprep.subr.bf16.mxu0 0
    %2614 = vmatpush1.bf16.msra.mxu0 0
    %2615 = vmatprep.subr.bf16.mxu0 0
    %2616 = vmatpush1.bf16.msra.mxu0 0
    %2617 = vmatprep.subr.bf16.mxu0 0
    %2618 = vmatpush1.bf16.msra.mxu0 0
    %2619 = vmatprep.subr.bf16.mxu0 0
    %2620 = vmatpush1.bf16.msra.mxu0 0
    %2621 = vmatprep.subr.bf16.mxu0 0
    %2622 = vmatpush1.bf16.msra.mxu0 0
    %2623 = vmatprep.mubr.bf16.mxu0 0
    %2624 = vmatmul.mubr.bf16.gmra.mrb[0].mxu0 %v1909
    %v2625 = vpop.f32.mrb[0].mxu0
    %v2626 = vadd.f32 0.0, %v2625
    %v2627 = vpop.f32.mrb[0].mxu0
    %v2628 = vadd.f32 0.0, %v2627
    %v2629 = vpop.f32.mrb[0].mxu0
    %v2630 = vpop.f32.mrb[0].mxu0
    %2631 = vdwg.mxu0
    %2632 = vmatprep.subr.bf16.mxu0 %v2347
    %2633 = vmatpush1.bf16.msra.mxu0 %v2346
    %2634 = vmatprep.subr.bf16.mxu0 %v2360
    %2635 = vmatpush1.bf16.msra.mxu0 %v2359
    %2636 = vmatprep.subr.bf16.mxu0 %v2373
    %2637 = vmatpush1.bf16.msra.mxu0 %v2372
    %2638 = vmatprep.subr.bf16.mxu0 %v2386
    %2639 = vmatpush1.bf16.msra.mxu0 %v2385
    %2640 = vmatprep.subr.bf16.mxu0 %v2399
    %2641 = vmatpush1.bf16.msra.mxu0 %v2398
    %2642 = vmatprep.subr.bf16.mxu0 %v2412
    %2643 = vmatpush1.bf16.msra.mxu0 %v2411
    %2644 = vmatprep.subr.bf16.mxu0 %v2425
    %2645 = vmatpush1.bf16.msra.mxu0 %v2424
    %2646 = vmatprep.subr.bf16.mxu0 %v2438
    %2647 = vmatpush1.bf16.msra.mxu0 %v2437
    %2648 = vmatprep.subr.bf16.mxu0 0
    %2649 = vmatpush1.bf16.msra.mxu0 0
    %2650 = vmatprep.subr.bf16.mxu0 0
    %2651 = vmatpush1.bf16.msra.mxu0 0
    %2652 = vmatprep.subr.bf16.mxu0 0
    %2653 = vmatpush1.bf16.msra.mxu0 0
    %2654 = vmatprep.subr.bf16.mxu0 0
    %2655 = vmatpush1.bf16.msra.mxu0 0
    %2656 = vmatprep.subr.bf16.mxu0 0
    %2657 = vmatpush1.bf16.msra.mxu0 0
    %2658 = vmatprep.subr.bf16.mxu0 0
    %2659 = vmatpush1.bf16.msra.mxu0 0
    %2660 = vmatprep.subr.bf16.mxu0 0
    %2661 = vmatpush1.bf16.msra.mxu0 0
    %2662 = vmatprep.subr.bf16.mxu0 0
    %2663 = vmatpush1.bf16.msra.mxu0 0
    %2664 = vmatprep.mubr.bf16.mxu0 0
    %2665 = vmatmul.mubr.bf16.gmra.mrb[0].mxu0 %v1909
    %v2666 = vpop.f32.mrb[0].mxu0
    %v2667 = vadd.f32 0.0, %v2666
    %v2668 = vpop.f32.mrb[0].mxu0
    %v2669 = vadd.f32 0.0, %v2668
    %v2670 = vpop.f32.mrb[0].mxu0
    %v2671 = vpop.f32.mrb[0].mxu0
    %2672 = vdwg.mxu0
    %2673 = vmatprep.subr.bf16.mxu0 %v2349
    %2674 = vmatpush1.bf16.msra.mxu0 %v2348
    %2675 = vmatprep.subr.bf16.mxu0 %v2362
    %2676 = vmatpush1.bf16.msra.mxu0 %v2361
    %2677 = vmatprep.subr.bf16.mxu0 %v2375
    %2678 = vmatpush1.bf16.msra.mxu0 %v2374
    %2679 = vmatprep.subr.bf16.mxu0 %v2388
    %2680 = vmatpush1.bf16.msra.mxu0 %v2387
    %2681 = vmatprep.subr.bf16.mxu0 %v2401
    %2682 = vmatpush1.bf16.msra.mxu0 %v2400
    %2683 = vmatprep.subr.bf16.mxu0 %v2414
    %2684 = vmatpush1.bf16.msra.mxu0 %v2413
    %2685 = vmatprep.subr.bf16.mxu0 %v2427
    %2686 = vmatpush1.bf16.msra.mxu0 %v2426
    %2687 = vmatprep.subr.bf16.mxu0 %v2440
    %2688 = vmatpush1.bf16.msra.mxu0 %v2439
    %2689 = vmatprep.subr.bf16.mxu0 0
    %2690 = vmatpush1.bf16.msra.mxu0 0
    %2691 = vmatprep.subr.bf16.mxu0 0
    %2692 = vmatpush1.bf16.msra.mxu0 0
    %2693 = vmatprep.subr.bf16.mxu0 0
    %2694 = vmatpush1.bf16.msra.mxu0 0
    %2695 = vmatprep.subr.bf16.mxu0 0
    %2696 = vmatpush1.bf16.msra.mxu0 0
    %2697 = vmatprep.subr.bf16.mxu0 0
    %2698 = vmatpush1.bf16.msra.mxu0 0
    %2699 = vmatprep.subr.bf16.mxu0 0
    %2700 = vmatpush1.bf16.msra.mxu0 0
    %2701 = vmatprep.subr.bf16.mxu0 0
    %2702 = vmatpush1.bf16.msra.mxu0 0
    %2703 = vmatprep.subr.bf16.mxu0 0
    %2704 = vmatpush1.bf16.msra.mxu0 0
    %2705 = vmatprep.mubr.bf16.mxu0 0
    %2706 = vmatmul.mubr.bf16.gmra.mrb[0].mxu0 %v1909
    %v2707 = vpop.f32.mrb[0].mxu0
    %v2708 = vadd.f32 0.0, %v2707
    %v2709 = vpop.f32.mrb[0].mxu0
    %v2710 = vadd.f32 0.0, %v2709
    %v2711 = vpop.f32.mrb[0].mxu0
    %v2712 = vpop.f32.mrb[0].mxu0
    %2713 = vdwg.mxu0
    %2714 = vmatprep.subr.bf16.mxu0 %v2351
    %2715 = vmatpush1.bf16.msra.mxu0 %v2350
    %2716 = vmatprep.subr.bf16.mxu0 %v2364
    %2717 = vmatpush1.bf16.msra.mxu0 %v2363
    %2718 = vmatprep.subr.bf16.mxu0 %v2377
    %2719 = vmatpush1.bf16.msra.mxu0 %v2376
    %2720 = vmatprep.subr.bf16.mxu0 %v2390
    %2721 = vmatpush1.bf16.msra.mxu0 %v2389
    %2722 = vmatprep.subr.bf16.mxu0 %v2403
    %2723 = vmatpush1.bf16.msra.mxu0 %v2402
    %2724 = vmatprep.subr.bf16.mxu0 %v2416
    %2725 = vmatpush1.bf16.msra.mxu0 %v2415
    %2726 = vmatprep.subr.bf16.mxu0 %v2429
    %2727 = vmatpush1.bf16.msra.mxu0 %v2428
    %2728 = vmatprep.subr.bf16.mxu0 %v2442
    %2729 = vmatpush1.bf16.msra.mxu0 %v2441
    %2730 = vmatprep.subr.bf16.mxu0 0
    %2731 = vmatpush1.bf16.msra.mxu0 0
    %2732 = vmatprep.subr.bf16.mxu0 0
    %2733 = vmatpush1.bf16.msra.mxu0 0
    %2734 = vmatprep.subr.bf16.mxu0 0
    %2735 = vmatpush1.bf16.msra.mxu0 0
    %2736 = vmatprep.subr.bf16.mxu0 0
    %2737 = vmatpush1.bf16.msra.mxu0 0
    %2738 = vmatprep.subr.bf16.mxu0 0
    %2739 = vmatpush1.bf16.msra.mxu0 0
    %2740 = vmatprep.subr.bf16.mxu0 0
    %2741 = vmatpush1.bf16.msra.mxu0 0
    %2742 = vmatprep.subr.bf16.mxu0 0
    %2743 = vmatpush1.bf16.msra.mxu0 0
    %2744 = vmatprep.subr.bf16.mxu0 0
    %2745 = vmatpush1.bf16.msra.mxu0 0
    %2746 = vmatprep.mubr.bf16.mxu0 0
    %2747 = vmatmul.mubr.bf16.gmra.mrb[0].mxu0 %v1909
    %v2748 = vpop.f32.mrb[0].mxu0
    %v2749 = vadd.f32 0.0, %v2748
    %v2750 = vpop.f32.mrb[0].mxu0
    %v2751 = vadd.f32 0.0, %v2750
    %v2752 = vpop.f32.mrb[0].mxu0
    %v2753 = vpop.f32.mrb[0].mxu0
    %2754 = vdwg.mxu0
    %2755 = vmatprep.subr.bf16.mxu0 %v2353
    %2756 = vmatpush1.bf16.msra.mxu0 %v2352
    %2757 = vmatprep.subr.bf16.mxu0 %v2366
    %2758 = vmatpush1.bf16.msra.mxu0 %v2365
    %2759 = vmatprep.subr.bf16.mxu0 %v2379
    %2760 = vmatpush1.bf16.msra.mxu0 %v2378
    %2761 = vmatprep.subr.bf16.mxu0 %v2392
    %2762 = vmatpush1.bf16.msra.mxu0 %v2391
    %2763 = vmatprep.subr.bf16.mxu0 %v2405
    %2764 = vmatpush1.bf16.msra.mxu0 %v2404
    %2765 = vmatprep.subr.bf16.mxu0 %v2418
    %2766 = vmatpush1.bf16.msra.mxu0 %v2417
    %2767 = vmatprep.subr.bf16.mxu0 %v2431
    %2768 = vmatpush1.bf16.msra.mxu0 %v2430
    %2769 = vmatprep.subr.bf16.mxu0 %v2444
    %2770 = vmatpush1.bf16.msra.mxu0 %v2443
    %2771 = vmatprep.subr.bf16.mxu0 0
    %2772 = vmatpush1.bf16.msra.mxu0 0
    %2773 = vmatprep.subr.bf16.mxu0 0
    %2774 = vmatpush1.bf16.msra.mxu0 0
    %2775 = vmatprep.subr.bf16.mxu0 0
    %2776 = vmatpush1.bf16.msra.mxu0 0
    %2777 = vmatprep.subr.bf16.mxu0 0
    %2778 = vmatpush1.bf16.msra.mxu0 0
    %2779 = vmatprep.subr.bf16.mxu0 0
    %2780 = vmatpush1.bf16.msra.mxu0 0
    %2781 = vmatprep.subr.bf16.mxu0 0
    %2782 = vmatpush1.bf16.msra.mxu0 0
    %2783 = vmatprep.subr.bf16.mxu0 0
    %2784 = vmatpush1.bf16.msra.mxu0 0
    %2785 = vmatprep.subr.bf16.mxu0 0
    %2786 = vmatpush1.bf16.msra.mxu0 0
    %2787 = vmatprep.mubr.bf16.mxu0 0
    %2788 = vmatmul.mubr.bf16.gmra.mrb[0].mxu0 %v1909
    %v2789 = vpop.f32.mrb[0].mxu0
    %v2790 = vadd.f32 0.0, %v2789
    %v2791 = vpop.f32.mrb[0].mxu0
    %v2792 = vadd.f32 0.0, %v2791
    %v2793 = vpop.f32.mrb[0].mxu0
    %v2794 = vpop.f32.mrb[0].mxu0
    %2795 = vdwg.mxu0
    %2796 = vmatprep.subr.bf16.mxu0 0
    %2797 = vmatpush1.bf16.msra.mxu0 %v2354
    %2798 = vmatprep.subr.bf16.mxu0 0
    %2799 = vmatpush1.bf16.msra.mxu0 %v2367
    %2800 = vmatprep.subr.bf16.mxu0 0
    %2801 = vmatpush1.bf16.msra.mxu0 %v2380
    %2802 = vmatprep.subr.bf16.mxu0 0
    %2803 = vmatpush1.bf16.msra.mxu0 %v2393
    %2804 = vmatprep.subr.bf16.mxu0 0
    %2805 = vmatpush1.bf16.msra.mxu0 %v2406
    %2806 = vmatprep.subr.bf16.mxu0 0
    %2807 = vmatpush1.bf16.msra.mxu0 %v2419
    %2808 = vmatprep.subr.bf16.mxu0 0
    %2809 = vmatpush1.bf16.msra.mxu0 %v2432
    %2810 = vmatprep.subr.bf16.mxu0 0
    %2811 = vmatpush1.bf16.msra.mxu0 %v2445
    %2812 = vmatprep.subr.bf16.mxu0 0
    %2813 = vmatpush1.bf16.msra.mxu0 0
    %2814 = vmatprep.subr.bf16.mxu0 0
    %2815 = vmatpush1.bf16.msra.mxu0 0
    %2816 = vmatprep.subr.bf16.mxu0 0
    %2817 = vmatpush1.bf16.msra.mxu0 0
    %2818 = vmatprep.subr.bf16.mxu0 0
    %2819 = vmatpush1.bf16.msra.mxu0 0
    %2820 = vmatprep.subr.bf16.mxu0 0
    %2821 = vmatpush1.bf16.msra.mxu0 0
    %2822 = vmatprep.subr.bf16.mxu0 0
    %2823 = vmatpush1.bf16.msra.mxu0 0
    %2824 = vmatprep.subr.bf16.mxu0 0
    %2825 = vmatpush1.bf16.msra.mxu0 0
    %2826 = vmatprep.subr.bf16.mxu0 0
    %2827 = vmatpush1.bf16.msra.mxu0 0
    %2828 = vmatprep.mubr.bf16.mxu0 0
    %2829 = vmatmul.mubr.bf16.gmra.mrb[0].mxu0 %v1909
    %v2830 = vpop.f32.mrb[0].mxu0
    %v2831 = vadd.f32 0.0, %v2830
    %v2832 = vpop.f32.mrb[0].mxu0
    %v2833 = vpop.f32.mrb[0].mxu0
    %v2834 = vpop.f32.mrb[0].mxu0
    %2835 = vdwg.mxu0
    %v2836 = vpack.c.bf16 %v2585, %v2585
    %v2837 = vpack.c.bf16 %v2587, %v2587
    %v2838 = vpack.c.bf16 %v2626, %v2626
    %v2839 = vpack.c.bf16 %v2628, %v2628
    %v2840 = vpack.c.bf16 %v2667, %v2667
    %v2841 = vpack.c.bf16 %v2669, %v2669
    %v2842 = vpack.c.bf16 %v2708, %v2708
    %v2843 = vpack.c.bf16 %v2710, %v2710
    %v2844 = vpack.c.bf16 %v2749, %v2749
    %v2845 = vpack.c.bf16 %v2751, %v2751
    %v2846 = vpack.c.bf16 %v2790, %v2790
    %v2847 = vpack.c.bf16 %v2792, %v2792
    %v2848 = vpack.c.bf16 %v2831, %v2831
    %v2862 = vunpack.c.l.b16 %v2836
    %v2863 = vunpack.c.l.b16 %v2837
    %v2864 = vunpack.c.l.b16 %v2838
    %v2865 = vunpack.c.l.b16 %v2839
    %v2866 = vunpack.c.l.b16 %v2840
    %v2867 = vunpack.c.l.b16 %v2841
    %v2868 = vunpack.c.l.b16 %v2842
    %v2869 = vunpack.c.l.b16 %v2843
    %v2870 = vunpack.c.l.b16 %v2844
    %v2871 = vunpack.c.l.b16 %v2845
    %v2872 = vunpack.c.l.b16 %v2846
    %v2873 = vunpack.c.l.b16 %v2847
    %v2874 = vunpack.c.l.b16 %v2848
    %v2875 = vpack.c.b16 %v2863, %v2862
    %v2876 = vpack.c.b16 %v2865, %v2864
    %v2877 = vpack.c.b16 %v2867, %v2866
    %v2878 = vpack.c.b16 %v2869, %v2868
    %v2879 = vpack.c.b16 %v2871, %v2870
    %v2880 = vpack.c.b16 %v2873, %v2872
    %v2881 = vpack.c.b16 %v2874, %v2874
    %2889 = vst [vmem:[#allocation10] sm:$0xff] %v2875
    %2890 = vst [vmem:[#allocation10 + $0x8] sm:$0xff] %v2876
    %2891 = vst [vmem:[#allocation10 + $0x10] sm:$0xff] %v2877
    %2892 = vst [vmem:[#allocation10 + $0x18] sm:$0xff] %v2878
    %2893 = vst [vmem:[#allocation10 + $0x20] sm:$0xff] %v2879
    %2894 = vst [vmem:[#allocation10 + $0x28] sm:$0xff] %v2880
    %vm2895 = vcmask 257024
    %2896 = vst.msk [vmem:[#allocation10 + $0x30] sm:$0xf] %vm2895, %v2881
    // Predicated region
    $region50: #{tpu_custom_call.1} parent=1 // pred_check
      _
    $region51: #{tpu_custom_call.1} parent=1 // pred_check_branch
      %2898 = sbr.rel (0) target = $region53
    $region52: #{tpu_custom_call.1} parent=1 // pred_region
      %s2900 = ssub.s32 832, 832
      %2901 = vsyncadd [#allocation4], %s2900
      %s2903 = sshll.u32 [#allocation10], 4
      %s2904 = int_to_ptr.vmem [resolvable:$true] %s2903
      %2906 = dma.vmem_to_hbm [thread:$0]  %s2904, 832, %s8, [#allocation4]
    $region53: #{tpu_custom_call.1} parent=1 // pred_fallthru
      _
    // Predicated region
    $region54: #{tpu_custom_call.1} parent=1 // pred_check
      _
    $region55: #{tpu_custom_call.1} parent=1 // pred_check_branch
      %2908 = sbr.rel (0) target = $region57
    $region56: #{tpu_custom_call.1} parent=1 // pred_region
      %2909 = dma.done [#allocation4], 832
    $region57: #{tpu_custom_call.1} parent=1 // pred_fallthru
      _
    %2910 = vsyncpa [#allocation3], 1
    %2911 = vsyncpa [#allocation6], 1
    %2912 = vsyncpa [#allocation9], 1
    %2913 = vsyncpa [#allocation4], 1

</llo_original>
